<compile_context>
chip_gen: v7x
topology: tpu7x:2x2x1
jax: 0.10.0
libtpu: 0.0.40
codegen_flags: <defaults>
</compile_context>

<pallas_src>
import math

import jax
import jax.numpy as jnp
from jax.experimental import pallas as pl
from jax.experimental.pallas import tpu as pltpu


LANE = 128       # vreg lane width / lane-dense unit
SUBLANE = 8      # f32 vreg sublane height
BF16_SUBLANE = 16


def _round_up(x, k):
    return (x + k - 1) // k * k


def _cdiv(a, b):
    return -(-a // b)


def tsoc_kernel(y_ref, w1_ref, b1_ref, w2_ref, b2_ref,
                w3_ref, b3_ref, w4_ref, b4_ref, o_ref):
    # Whole network fused in one kernel; only the batch dim is tiled by the grid.
    # Activations kept in f32 (VPU relu / bias add); matmul operands cast to
    # bf16 with f32 accumulation on the MXU.
    y = y_ref[...]                                             # (tb, m_p) f32

    z = jnp.dot(y.astype(jnp.bfloat16), w1_ref[...],
                preferred_element_type=jnp.float32) + b1_ref[...]
    z = jnp.maximum(z, 0.0)

    z = jnp.dot(z.astype(jnp.bfloat16), w2_ref[...],
                preferred_element_type=jnp.float32) + b2_ref[...]
    z = jnp.maximum(z, 0.0)

    z = jnp.dot(z.astype(jnp.bfloat16), w3_ref[...],
                preferred_element_type=jnp.float32) + b3_ref[...]
    z = jnp.maximum(z, 0.0)

    logits = jnp.dot(z.astype(jnp.bfloat16), w4_ref[...],
                     preferred_element_type=jnp.float32) + b4_ref[...]

    # sigmoid(x) = 0.5*tanh(0.5*x) + 0.5 : one EUP transcendental, no overflow.
    sig = 0.5 * jnp.tanh(0.5 * logits) + 0.5
    o_ref[...] = sig.astype(o_ref.dtype)                       # (tb, n_p) bf16


def _choose_batch_tiling(B, batch_tile):
    """Pick (tb, B_p, steps): large tiles, even step count when steps > 1."""
    B_rup = _round_up(B, SUBLANE)
    tb_cap = _round_up(min(batch_tile, B_rup), SUBLANE)
    steps = _cdiv(B_rup, tb_cap)
    if steps > 1 and steps % 2 == 1:
        steps += 1            # even parallel grid -> clean split on v7x's 2 TCs
    tb = _round_up(_cdiv(B_rup, steps), SUBLANE)
    B_p = tb * steps
    return tb, B_p, steps


def tsoc_forward(y, padded_params, n, *, batch_tile=1024):
    """TSOC forward pass with one fused Pallas kernel.

    y:             (B, m) float32 measurement vectors.
    padded_params: dict from pad_params() -- bf16 weights (in, out) with the
                   output axes lane-padded to 128 (w1 input padded only to 16),
                   and lane-padded f32 biases (1, out).
    n:             original output width (result sliced back to (B, n) f32).
    """
    B, m = y.shape
    w1, b1 = padded_params["w1"], padded_params["b1"]
    w2, b2 = padded_params["w2"], padded_params["b2"]
    w3, b3 = padded_params["w3"], padded_params["b3"]
    w4, b4 = padded_params["w4"], padded_params["b4"]

    m_p = w1.shape[0]          # input width, padded only to bf16 sublane (16)
    h_p = w2.shape[0]          # padded hidden width (2n -> 128k)
    n_p = w4.shape[1]          # padded output width (n -> 128k)

    # Feature pad on y only up to the bf16 sublane multiple (no-op for m % 16 == 0).
    if m_p != m:
        y = jnp.pad(y, ((0, 0), (0, m_p - m)))

    # Batch tiling.
    tb, B_p, steps = _choose_batch_tiling(B, batch_tile)
    if B_p != B:
        y = jnp.pad(y, ((0, B_p - B), (0, 0)))
    grid = (steps,)

    def batch_map(i):
        return (i, 0)

    def full_map(i):
        return (0, 0)

    in_specs = [
        pl.BlockSpec((tb, m_p), batch_map),        # y  (last dim == full array dim)
        pl.BlockSpec((m_p, h_p), full_map),        # w1
        pl.BlockSpec((1, h_p), full_map),          # b1
        pl.BlockSpec((h_p, h_p), full_map),        # w2
        pl.BlockSpec((1, h_p), full_map),          # b2
        pl.BlockSpec((h_p, n_p), full_map),        # w3
        pl.BlockSpec((1, n_p), full_map),          # b3
        pl.BlockSpec((n_p, n_p), full_map),        # w4
        pl.BlockSpec((1, n_p), full_map),          # b4
    ]
    out_spec = pl.BlockSpec((tb, n_p), batch_map)

    # Explicit VMEM budget: double-buffered y/out blocks + weights, plus rough
    # headroom for the f32 intermediates, so big batch tiles compile on v5e's
    # 16 MiB default scoped limit without starving the compiler.
    weight_bytes = sum(int(a.size) * a.dtype.itemsize
                       for a in (w1, b1, w2, b2, w3, b3, w4, b4))
    io_bytes = tb * m_p * 4 + tb * n_p * 2        # y block (f32) + out block (bf16)
    scratch_bytes = 4 * tb * h_p * 4              # f32 activation intermediates
    vmem_est = 2 * (io_bytes + weight_bytes) + scratch_bytes
    vmem_limit = int(min(max(32 << 20, int(vmem_est * 1.5)), 100 << 20))

    out_padded = pl.pallas_call(
        tsoc_kernel,
        out_shape=jax.ShapeDtypeStruct((B_p, n_p), jnp.bfloat16),
        grid_spec=pltpu.PrefetchScalarGridSpec(
            num_scalar_prefetch=0,
            grid=grid,
            in_specs=in_specs,
            out_specs=out_spec,
        ),
        compiler_params=pltpu.CompilerParams(
            dimension_semantics=("parallel",),     # batch tiles across v7x's 2 TCs
            vmem_limit_bytes=vmem_limit,
        ),
    )(y, w1, b1, w2, b2, w3, b3, w4, b4)

    # Tiny slice + cast; fused into the same jit as the pallas_call.
    return out_padded[:B, :n].astype(jnp.float32)


def init_params(key, n, m):
    """f32 params in (in, out) layout, mimicking PyTorch nn.Linear default init."""
    def linear(key, fan_in, fan_out):
        kw, kb = jax.random.split(key)
        bound = 1.0 / math.sqrt(fan_in)
        w = jax.random.uniform(kw, (fan_in, fan_out), jnp.float32, -bound, bound)
        b = jax.random.uniform(kb, (1, fan_out), jnp.float32, -bound, bound)
        return w, b

    k1, k2, k3, k4 = jax.random.split(key, 4)
    w1, b1 = linear(k1, m, 2 * n)
    w2, b2 = linear(k2, 2 * n, 2 * n)
    w3, b3 = linear(k3, 2 * n, n)
    w4, b4 = linear(k4, n, n)
    return dict(w1=w1, b1=b1, w2=w2, b2=b2, w3=w3, b3=b3, w4=w4, b4=b4)


def pad_params(p):
    """Pad feature axes; weights -> bf16, biases stay f32.

    w1's input axis is padded only to the bf16 sublane multiple (16) so the
    HBM-resident y never has to be lane-padded to 128; all hidden/output axes
    are lane-padded to 128 so every activation and the output block stay
    lane-dense for the MXU and for unmasked vst.
    """
    def pad_w(w, in_mult):
        i, o = w.shape
        w = jnp.pad(w, ((0, _round_up(i, in_mult) - i),
                        (0, _round_up(o, LANE) - o)))
        return w.astype(jnp.bfloat16)

    def pad_b(b):
        o = b.shape[1]
        return jnp.pad(b, ((0, 0), (0, _round_up(o, LANE) - o))).astype(jnp.float32)

    return dict(
        w1=pad_w(p["w1"], BF16_SUBLANE), b1=pad_b(p["b1"]),
        w2=pad_w(p["w2"], LANE),         b2=pad_b(p["b2"]),
        w3=pad_w(p["w3"], LANE),         b3=pad_b(p["b3"]),
        w4=pad_w(p["w4"], LANE),         b4=pad_b(p["b4"]),
    )


def tsoc_reference(y, p):
    z = jax.nn.relu(y @ p["w1"] + p["b1"])
    z = jax.nn.relu(z @ p["w2"] + p["b2"])
    z = jax.nn.relu(z @ p["w3"] + p["b3"])
    return jax.nn.sigmoid(z @ p["w4"] + p["b4"])


if __name__ == "__main__":
    # TSOC(n=16, m=32): fc1 32->32, fc2 32->32, fc3 32->16, fc4 16->16.
    n, m = 16, 32
    B = 512          # batch of measurement vectors

    key = jax.random.PRNGKey(0)
    kp, kx = jax.random.split(key)
    raw_params = init_params(kp, n, m)
    padded_params = pad_params(raw_params)
    y = jax.random.normal(kx, (B, m), jnp.float32)

    # Fold pad + pallas_call + slice + cast into one jit.
    fwd = jax.jit(tsoc_forward, static_argnums=(2,), static_argnames=("batch_tile",))

    # batch_tile=256 here exercises the multi-step (even) parallel grid at this
    # small demo batch; the default batch_tile=1024 is the production setting.
    out = fwd(y, padded_params, n, batch_tile=256)
    out = jax.block_until_ready(out)

    ref = tsoc_reference(y, raw_params)
    assert out.shape == (B, n)
    # bf16 matmul operands + bf16 output store -> loosened tolerance vs pure-f32 ref.
    assert jnp.allclose(out, ref, atol=2e-2, rtol=2e-2), float(jnp.max(jnp.abs(out - ref)))

    print("KERNEL_OK")
</pallas_src>

<mosaic_0001>
module attributes {stable_mosaic.version = 11 : i64} {
  func.func @tsoc_kernel(%arg0: i32, %arg1: memref<256x32xf32, #tpu.memory_space<vmem>>, %arg2: memref<32x128xbf16, #tpu.memory_space<vmem>>, %arg3: memref<1x128xf32, #tpu.memory_space<vmem>>, %arg4: memref<128x128xbf16, #tpu.memory_space<vmem>>, %arg5: memref<1x128xf32, #tpu.memory_space<vmem>>, %arg6: memref<128x128xbf16, #tpu.memory_space<vmem>>, %arg7: memref<1x128xf32, #tpu.memory_space<vmem>>, %arg8: memref<128x128xbf16, #tpu.memory_space<vmem>>, %arg9: memref<1x128xf32, #tpu.memory_space<vmem>>, %arg10: memref<256x128xbf16, #tpu.memory_space<vmem>>) attributes {dimension_semantics = [#tpu.dimension_semantics<parallel>], iteration_bounds = array<i64: 2>, scalar_prefetch = 0 : i64, scratch_operands = 0 : i64, tpu.core_type = #tpu.core_type<tc>, window_params = [{transform_indices = @transform_0, window_bounds = array<i64: 256, 32>}, {pipeline_mode = #tpu.pipeline_mode<synchronous>, transform_indices = @transform_1, window_bounds = array<i64: 32, 128>}, {pipeline_mode = #tpu.pipeline_mode<synchronous>, transform_indices = @transform_2, window_bounds = array<i64: 1, 128>}, {pipeline_mode = #tpu.pipeline_mode<synchronous>, transform_indices = @transform_3, window_bounds = array<i64: 128, 128>}, {pipeline_mode = #tpu.pipeline_mode<synchronous>, transform_indices = @transform_4, window_bounds = array<i64: 1, 128>}, {pipeline_mode = #tpu.pipeline_mode<synchronous>, transform_indices = @transform_5, window_bounds = array<i64: 128, 128>}, {pipeline_mode = #tpu.pipeline_mode<synchronous>, transform_indices = @transform_6, window_bounds = array<i64: 1, 128>}, {pipeline_mode = #tpu.pipeline_mode<synchronous>, transform_indices = @transform_7, window_bounds = array<i64: 128, 128>}, {pipeline_mode = #tpu.pipeline_mode<synchronous>, transform_indices = @transform_8, window_bounds = array<i64: 1, 128>}, {transform_indices = @transform_9, window_bounds = array<i64: 256, 128>}]} {
    %c0 = arith.constant 0 : index
    %c0_0 = arith.constant 0 : index
    %0 = vector.load %arg1[%c0, %c0_0] : memref<256x32xf32, #tpu.memory_space<vmem>>, vector<256x32xf32>
    %1 = arith.truncf %0 : vector<256x32xf32> to vector<256x32xbf16>
    %c0_1 = arith.constant 0 : index
    %c0_2 = arith.constant 0 : index
    %2 = vector.load %arg2[%c0_1, %c0_2] : memref<32x128xbf16, #tpu.memory_space<vmem>>, vector<32x128xbf16>
    %cst = arith.constant dense<0.000000e+00> : vector<256x128xf32>
    %3 = tpu.matmul %1, %2, %cst {dimension_numbers = #tpu.dot_dimension_numbers<[1], [0], [0], [1], [0, 0, 1, 1], [], []>} : vector<256x32xbf16>, vector<32x128xbf16>, vector<256x128xf32> -> vector<256x128xf32>
    %c0_3 = arith.constant 0 : index
    %c0_4 = arith.constant 0 : index
    %4 = vector.load %arg3[%c0_3, %c0_4] : memref<1x128xf32, #tpu.memory_space<vmem>>, vector<1x128xf32>
    %5 = vector.broadcast %4 : vector<1x128xf32> to vector<256x128xf32>
    %6 = arith.addf %3, %5 : vector<256x128xf32>
    %cst_5 = arith.constant 0.000000e+00 : f32
    %7 = vector.broadcast %cst_5 : f32 to vector<256x128xf32>
    %8 = arith.maximumf %6, %7 : vector<256x128xf32>
    %9 = arith.truncf %8 : vector<256x128xf32> to vector<256x128xbf16>
    %c0_6 = arith.constant 0 : index
    %c0_7 = arith.constant 0 : index
    %10 = vector.load %arg4[%c0_6, %c0_7] : memref<128x128xbf16, #tpu.memory_space<vmem>>, vector<128x128xbf16>
    %cst_8 = arith.constant dense<0.000000e+00> : vector<256x128xf32>
    %11 = tpu.matmul %9, %10, %cst_8 {dimension_numbers = #tpu.dot_dimension_numbers<[1], [0], [0], [1], [0, 0, 1, 1], [], []>} : vector<256x128xbf16>, vector<128x128xbf16>, vector<256x128xf32> -> vector<256x128xf32>
    %c0_9 = arith.constant 0 : index
    %c0_10 = arith.constant 0 : index
    %12 = vector.load %arg5[%c0_9, %c0_10] : memref<1x128xf32, #tpu.memory_space<vmem>>, vector<1x128xf32>
    %13 = vector.broadcast %12 : vector<1x128xf32> to vector<256x128xf32>
    %14 = arith.addf %11, %13 : vector<256x128xf32>
    %cst_11 = arith.constant 0.000000e+00 : f32
    %15 = vector.broadcast %cst_11 : f32 to vector<256x128xf32>
    %16 = arith.maximumf %14, %15 : vector<256x128xf32>
    %17 = arith.truncf %16 : vector<256x128xf32> to vector<256x128xbf16>
    %c0_12 = arith.constant 0 : index
    %c0_13 = arith.constant 0 : index
    %18 = vector.load %arg6[%c0_12, %c0_13] : memref<128x128xbf16, #tpu.memory_space<vmem>>, vector<128x128xbf16>
    %cst_14 = arith.constant dense<0.000000e+00> : vector<256x128xf32>
    %19 = tpu.matmul %17, %18, %cst_14 {dimension_numbers = #tpu.dot_dimension_numbers<[1], [0], [0], [1], [0, 0, 1, 1], [], []>} : vector<256x128xbf16>, vector<128x128xbf16>, vector<256x128xf32> -> vector<256x128xf32>
    %c0_15 = arith.constant 0 : index
    %c0_16 = arith.constant 0 : index
    %20 = vector.load %arg7[%c0_15, %c0_16] : memref<1x128xf32, #tpu.memory_space<vmem>>, vector<1x128xf32>
    %21 = vector.broadcast %20 : vector<1x128xf32> to vector<256x128xf32>
    %22 = arith.addf %19, %21 : vector<256x128xf32>
    %cst_17 = arith.constant 0.000000e+00 : f32
    %23 = vector.broadcast %cst_17 : f32 to vector<256x128xf32>
    %24 = arith.maximumf %22, %23 : vector<256x128xf32>
    %25 = arith.truncf %24 : vector<256x128xf32> to vector<256x128xbf16>
    %c0_18 = arith.constant 0 : index
    %c0_19 = arith.constant 0 : index
    %26 = vector.load %arg8[%c0_18, %c0_19] : memref<128x128xbf16, #tpu.memory_space<vmem>>, vector<128x128xbf16>
    %cst_20 = arith.constant dense<0.000000e+00> : vector<256x128xf32>
    %27 = tpu.matmul %25, %26, %cst_20 {dimension_numbers = #tpu.dot_dimension_numbers<[1], [0], [0], [1], [0, 0, 1, 1], [], []>} : vector<256x128xbf16>, vector<128x128xbf16>, vector<256x128xf32> -> vector<256x128xf32>
    %c0_21 = arith.constant 0 : index
    %c0_22 = arith.constant 0 : index
    %28 = vector.load %arg9[%c0_21, %c0_22] : memref<1x128xf32, #tpu.memory_space<vmem>>, vector<1x128xf32>
    %29 = vector.broadcast %28 : vector<1x128xf32> to vector<256x128xf32>
    %30 = arith.addf %27, %29 : vector<256x128xf32>
    %cst_23 = arith.constant 5.000000e-01 : f32
    %31 = vector.broadcast %cst_23 : f32 to vector<256x128xf32>
    %32 = arith.mulf %31, %30 : vector<256x128xf32>
    %33 = math.tanh %32 : vector<256x128xf32>
    %cst_24 = arith.constant 5.000000e-01 : f32
    %34 = vector.broadcast %cst_24 : f32 to vector<256x128xf32>
    %35 = arith.mulf %34, %33 : vector<256x128xf32>
    %cst_25 = arith.constant 5.000000e-01 : f32
    %36 = vector.broadcast %cst_25 : f32 to vector<256x128xf32>
    %37 = arith.addf %35, %36 : vector<256x128xf32>
    %38 = arith.truncf %37 : vector<256x128xf32> to vector<256x128xbf16>
    %c0_26 = arith.constant 0 : index
    %c0_27 = arith.constant 0 : index
    %39 = vector.load %arg10[%c0_26, %c0_27] : memref<256x128xbf16, #tpu.memory_space<vmem>>, vector<256x128xbf16>
    tpu.vector_store %arg10[%c0_26, %c0_27], %38 {strides = array<i32>} : memref<256x128xbf16, #tpu.memory_space<vmem>>, vector<256x128xbf16>,
    return
  }
  func.func @transform_0(%arg0: i32) -> (i32, i32) {
    %c0_i32 = arith.constant 0 : i32
    %c0_i32_0 = arith.constant 0 : i32
    return %arg0, %c0_i32 : i32, i32
  }
  func.func @transform_1(%arg0: i32) -> (i32, i32) {
    %c0_i32 = arith.constant 0 : i32
    %c0_i32_0 = arith.constant 0 : i32
    %c0_i32_1 = arith.constant 0 : i32
    return %c0_i32, %c0_i32_0 : i32, i32
  }
  func.func @transform_2(%arg0: i32) -> (i32, i32) {
    %c0_i32 = arith.constant 0 : i32
    %c0_i32_0 = arith.constant 0 : i32
    %c0_i32_1 = arith.constant 0 : i32
    return %c0_i32, %c0_i32_0 : i32, i32
  }
  func.func @transform_3(%arg0: i32) -> (i32, i32) {
    %c0_i32 = arith.constant 0 : i32
    %c0_i32_0 = arith.constant 0 : i32
    %c0_i32_1 = arith.constant 0 : i32
    return %c0_i32, %c0_i32_0 : i32, i32
  }
  func.func @transform_4(%arg0: i32) -> (i32, i32) {
    %c0_i32 = arith.constant 0 : i32
    %c0_i32_0 = arith.constant 0 : i32
    %c0_i32_1 = arith.constant 0 : i32
    return %c0_i32, %c0_i32_0 : i32, i32
  }
  func.func @transform_5(%arg0: i32) -> (i32, i32) {
    %c0_i32 = arith.constant 0 : i32
    %c0_i32_0 = arith.constant 0 : i32
    %c0_i32_1 = arith.constant 0 : i32
    return %c0_i32, %c0_i32_0 : i32, i32
  }
  func.func @transform_6(%arg0: i32) -> (i32, i32) {
    %c0_i32 = arith.constant 0 : i32
    %c0_i32_0 = arith.constant 0 : i32
    %c0_i32_1 = arith.constant 0 : i32
    return %c0_i32, %c0_i32_0 : i32, i32
  }
  func.func @transform_7(%arg0: i32) -> (i32, i32) {
    %c0_i32 = arith.constant 0 : i32
    %c0_i32_0 = arith.constant 0 : i32
    %c0_i32_1 = arith.constant 0 : i32
    return %c0_i32, %c0_i32_0 : i32, i32
  }
  func.func @transform_8(%arg0: i32) -> (i32, i32) {
    %c0_i32 = arith.constant 0 : i32
    %c0_i32_0 = arith.constant 0 : i32
    %c0_i32_1 = arith.constant 0 : i32
    return %c0_i32, %c0_i32_0 : i32, i32
  }
  func.func @transform_9(%arg0: i32) -> (i32, i32) {
    %c0_i32 = arith.constant 0 : i32
    %c0_i32_0 = arith.constant 0 : i32
    return %arg0, %c0_i32 : i32, i32
  }
}

</mosaic_0001>

<llo_original>
// kernel: tsoc_forward.1
$region0: #{tsoc_forward.1}
  #allocation0 [shape = 'u32[]', space=smem, size = 0x4, offset = 0x4, fixed_abs, tag = 'smem constant byte address 0x4 - core index']
  #allocation1 [shape = 'u32[144,128]{1,0:T(1,128)}', space=vmem, size = 0x12000, scoped, tag = 'internal scratch']
  %s0 = inlined_call_operand.vmem [shape: f32[512,32], index: 0, kind: input, shape index: {}]
  %s1 = inlined_call_operand.vmem [shape: bf16[32,128], index: 1, kind: input, shape index: {}]
  %s2 = inlined_call_operand.vmem [shape: f32[1,128], index: 2, kind: input, shape index: {}]
  %s3 = inlined_call_operand.vmem [shape: bf16[128,128], index: 3, kind: input, shape index: {}]
  %s4 = inlined_call_operand.vmem [shape: f32[1,128], index: 4, kind: input, shape index: {}]
  %s5 = inlined_call_operand.vmem [shape: bf16[128,128], index: 5, kind: input, shape index: {}]
  %s6 = inlined_call_operand.vmem [shape: f32[1,128], index: 6, kind: input, shape index: {}]
  %s7 = inlined_call_operand.vmem [shape: bf16[128,128], index: 7, kind: input, shape index: {}]
  %s8 = inlined_call_operand.vmem [shape: f32[1,128], index: 8, kind: input, shape index: {}]
  %s9 = inlined_call_operand.vmem [shape: bf16[512,128], index: 9, kind: output, shape index: {}]
  %s10 = sld [smem:[#allocation0]]
  $region69: #{tsoc_forward.1} parent=0
    _
  %s12 = ssub.s32 1, %s10
  %s13 = scalar_select 0, %s12, %s10
  loop: start=0, step=1, limit=4
  $region2: #{tsoc_forward.1} parent=0 // loop_pre_header
    _
  $region3: #{tsoc_forward.1} parent=0 // loop_header
    %s15 = sphi 0, %s19
    %p16 = scmp.ge.s32.totalorder %s15, 4
    %s25 = sphi 0, %s27
    %s28 = sphi 0, %s25
    %s29 = sphi 0, %s28
    %s45 = sphi 0, %s29
    %s49 = sphi 0, %s49
    %s51 = sphi 0, %s49
    %s52 = sphi 0, %s51
    %s66 = sphi 0, %s52
    %s70 = sphi 0, %s70
    %s72 = sphi 0, %s70
    %s73 = sphi 0, %s72
    %s87 = sphi 0, %s73
    %s91 = sphi 0, %s91
    %s93 = sphi 0, %s91
    %s94 = sphi 0, %s93
    %s108 = sphi 0, %s94
    %s112 = sphi 0, %s112
    %s114 = sphi 0, %s112
    %s115 = sphi 0, %s114
    %s129 = sphi 0, %s115
    %s133 = sphi 0, %s133
    %s135 = sphi 0, %s133
    %s136 = sphi 0, %s135
    %s150 = sphi 0, %s136
    %s154 = sphi 0, %s154
    %s156 = sphi 0, %s154
    %s157 = sphi 0, %s156
    %s171 = sphi 0, %s157
    %s175 = sphi 0, %s175
    %s177 = sphi 0, %s175
    %s178 = sphi 0, %s177
    %s192 = sphi 0, %s178
    %s196 = sphi 0, %s196
    %s198 = sphi 0, %s196
    %s199 = sphi 0, %s198
    %s213 = sphi 0, %s199
    %s219 = sphi 0, %s221
    %s222 = sphi 0, %s219
    %s223 = sphi 0, %s222
    %s239 = sphi 0, %s223
  $region4: #{tsoc_forward.1} parent=0 // loop_header_branch
    %18 = sbr.rel (%p16) target = $region8
  $region5: #{tsoc_forward.1} parent=0 // loop_body
    %s20 = ssub.s32 %s15, 1
    %s21 = ssub.s32 %s15, 2
    %s22 = sadd.s32 %s15, 1
    %s23 = ssub.s32 %s15, %s22
    %p24 = scmp.eq.s32.totalorder %s23, 0
    %s26 = sadd.s32 %s25, 1
    %s27 = scalar_select %p24, %s25, %s26
    %p30 = pneg %p24
    %p31 = scmp.eq.s32.totalorder %s15, 1
    %p32 = por %p30, %p31
    %p33 = scmp.ne.s32.totalorder %s25, %s28
    %p34 = scmp.eq.s32.totalorder %s15, 0
    %p35 = por %p33, %p34
    %p36 = scmp.ne.s32.totalorder %s25, %s28
    %p37 = scmp.eq.s32.totalorder %s20, 1
    %p38 = por %p36, %p37
    %p39 = scmp.ne.s32.totalorder %s28, %s29
    %p40 = scmp.eq.s32.totalorder %s20, 0
    %p41 = por %p39, %p40
    %p42 = scmp.ne.s32.totalorder %s28, %s29
    %p43 = scmp.eq.s32.totalorder %s21, 1
    %p44 = por %p42, %p43
    %p46 = scmp.ne.s32.totalorder %s29, %s45
    %p47 = scmp.eq.s32.totalorder %s21, 0
    %p48 = por %p46, %p47
    %s50 = sadd.s32 %s49, 1
    %p53 = scmp.eq.s32.totalorder %s15, 1
    %p54 = scmp.ne.s32.totalorder %s49, %s51
    %p55 = scmp.eq.s32.totalorder %s15, 0
    %p56 = por %p54, %p55
    %p57 = scmp.ne.s32.totalorder %s49, %s51
    %p58 = scmp.eq.s32.totalorder %s20, 1
    %p59 = por %p57, %p58
    %p60 = scmp.ne.s32.totalorder %s51, %s52
    %p61 = scmp.eq.s32.totalorder %s20, 0
    %p62 = por %p60, %p61
    %p63 = scmp.ne.s32.totalorder %s51, %s52
    %p64 = scmp.eq.s32.totalorder %s21, 1
    %p65 = por %p63, %p64
    %p67 = scmp.ne.s32.totalorder %s52, %s66
    %p68 = scmp.eq.s32.totalorder %s21, 0
    %p69 = por %p67, %p68
    %s71 = sadd.s32 %s70, 1
    %p74 = scmp.eq.s32.totalorder %s15, 1
    %p75 = scmp.ne.s32.totalorder %s70, %s72
    %p76 = scmp.eq.s32.totalorder %s15, 0
    %p77 = por %p75, %p76
    %p78 = scmp.ne.s32.totalorder %s70, %s72
    %p79 = scmp.eq.s32.totalorder %s20, 1
    %p80 = por %p78, %p79
    %p81 = scmp.ne.s32.totalorder %s72, %s73
    %p82 = scmp.eq.s32.totalorder %s20, 0
    %p83 = por %p81, %p82
    %p84 = scmp.ne.s32.totalorder %s72, %s73
    %p85 = scmp.eq.s32.totalorder %s21, 1
    %p86 = por %p84, %p85
    %p88 = scmp.ne.s32.totalorder %s73, %s87
    %p89 = scmp.eq.s32.totalorder %s21, 0
    %p90 = por %p88, %p89
    %s92 = sadd.s32 %s91, 1
    %p95 = scmp.eq.s32.totalorder %s15, 1
    %p96 = scmp.ne.s32.totalorder %s91, %s93
    %p97 = scmp.eq.s32.totalorder %s15, 0
    %p98 = por %p96, %p97
    %p99 = scmp.ne.s32.totalorder %s91, %s93
    %p100 = scmp.eq.s32.totalorder %s20, 1
    %p101 = por %p99, %p100
    %p102 = scmp.ne.s32.totalorder %s93, %s94
    %p103 = scmp.eq.s32.totalorder %s20, 0
    %p104 = por %p102, %p103
    %p105 = scmp.ne.s32.totalorder %s93, %s94
    %p106 = scmp.eq.s32.totalorder %s21, 1
    %p107 = por %p105, %p106
    %p109 = scmp.ne.s32.totalorder %s94, %s108
    %p110 = scmp.eq.s32.totalorder %s21, 0
    %p111 = por %p109, %p110
    %s113 = sadd.s32 %s112, 1
    %p116 = scmp.eq.s32.totalorder %s15, 1
    %p117 = scmp.ne.s32.totalorder %s112, %s114
    %p118 = scmp.eq.s32.totalorder %s15, 0
    %p119 = por %p117, %p118
    %p120 = scmp.ne.s32.totalorder %s112, %s114
    %p121 = scmp.eq.s32.totalorder %s20, 1
    %p122 = por %p120, %p121
    %p123 = scmp.ne.s32.totalorder %s114, %s115
    %p124 = scmp.eq.s32.totalorder %s20, 0
    %p125 = por %p123, %p124
    %p126 = scmp.ne.s32.totalorder %s114, %s115
    %p127 = scmp.eq.s32.totalorder %s21, 1
    %p128 = por %p126, %p127
    %p130 = scmp.ne.s32.totalorder %s115, %s129
    %p131 = scmp.eq.s32.totalorder %s21, 0
    %p132 = por %p130, %p131
    %s134 = sadd.s32 %s133, 1
    %p137 = scmp.eq.s32.totalorder %s15, 1
    %p138 = scmp.ne.s32.totalorder %s133, %s135
    %p139 = scmp.eq.s32.totalorder %s15, 0
    %p140 = por %p138, %p139
    %p141 = scmp.ne.s32.totalorder %s133, %s135
    %p142 = scmp.eq.s32.totalorder %s20, 1
    %p143 = por %p141, %p142
    %p144 = scmp.ne.s32.totalorder %s135, %s136
    %p145 = scmp.eq.s32.totalorder %s20, 0
    %p146 = por %p144, %p145
    %p147 = scmp.ne.s32.totalorder %s135, %s136
    %p148 = scmp.eq.s32.totalorder %s21, 1
    %p149 = por %p147, %p148
    %p151 = scmp.ne.s32.totalorder %s136, %s150
    %p152 = scmp.eq.s32.totalorder %s21, 0
    %p153 = por %p151, %p152
    %s155 = sadd.s32 %s154, 1
    %p158 = scmp.eq.s32.totalorder %s15, 1
    %p159 = scmp.ne.s32.totalorder %s154, %s156
    %p160 = scmp.eq.s32.totalorder %s15, 0
    %p161 = por %p159, %p160
    %p162 = scmp.ne.s32.totalorder %s154, %s156
    %p163 = scmp.eq.s32.totalorder %s20, 1
    %p164 = por %p162, %p163
    %p165 = scmp.ne.s32.totalorder %s156, %s157
    %p166 = scmp.eq.s32.totalorder %s20, 0
    %p167 = por %p165, %p166
    %p168 = scmp.ne.s32.totalorder %s156, %s157
    %p169 = scmp.eq.s32.totalorder %s21, 1
    %p170 = por %p168, %p169
    %p172 = scmp.ne.s32.totalorder %s157, %s171
    %p173 = scmp.eq.s32.totalorder %s21, 0
    %p174 = por %p172, %p173
    %s176 = sadd.s32 %s175, 1
    %p179 = scmp.eq.s32.totalorder %s15, 1
    %p180 = scmp.ne.s32.totalorder %s175, %s177
    %p181 = scmp.eq.s32.totalorder %s15, 0
    %p182 = por %p180, %p181
    %p183 = scmp.ne.s32.totalorder %s175, %s177
    %p184 = scmp.eq.s32.totalorder %s20, 1
    %p185 = por %p183, %p184
    %p186 = scmp.ne.s32.totalorder %s177, %s178
    %p187 = scmp.eq.s32.totalorder %s20, 0
    %p188 = por %p186, %p187
    %p189 = scmp.ne.s32.totalorder %s177, %s178
    %p190 = scmp.eq.s32.totalorder %s21, 1
    %p191 = por %p189, %p190
    %p193 = scmp.ne.s32.totalorder %s178, %s192
    %p194 = scmp.eq.s32.totalorder %s21, 0
    %p195 = por %p193, %p194
    %s197 = sadd.s32 %s196, 1
    %p200 = scmp.eq.s32.totalorder %s15, 1
    %p201 = scmp.ne.s32.totalorder %s196, %s198
    %p202 = scmp.eq.s32.totalorder %s15, 0
    %p203 = por %p201, %p202
    %p204 = scmp.ne.s32.totalorder %s196, %s198
    %p205 = scmp.eq.s32.totalorder %s20, 1
    %p206 = por %p204, %p205
    %p207 = scmp.ne.s32.totalorder %s198, %s199
    %p208 = scmp.eq.s32.totalorder %s20, 0
    %p209 = por %p207, %p208
    %p210 = scmp.ne.s32.totalorder %s198, %s199
    %p211 = scmp.eq.s32.totalorder %s21, 1
    %p212 = por %p210, %p211
    %p214 = scmp.ne.s32.totalorder %s199, %s213
    %p215 = scmp.eq.s32.totalorder %s21, 0
    %p216 = por %p214, %p215
    %s217 = ssub.s32 %s15, %s22
    %p218 = scmp.eq.s32.totalorder %s217, 0
    %s220 = sadd.s32 %s219, 1
    %s221 = scalar_select %p218, %s219, %s220
    %p224 = pneg %p218
    %p225 = scmp.eq.s32.totalorder %s15, 1
    %p226 = por %p224, %p225
    %p227 = scmp.ne.s32.totalorder %s219, %s222
    %p228 = scmp.eq.s32.totalorder %s15, 0
    %p229 = por %p227, %p228
    %p230 = scmp.ne.s32.totalorder %s219, %s222
    %p231 = scmp.eq.s32.totalorder %s20, 1
    %p232 = por %p230, %p231
    %p233 = scmp.ne.s32.totalorder %s222, %s223
    %p234 = scmp.eq.s32.totalorder %s20, 0
    %p235 = por %p233, %p234
    %p236 = scmp.ne.s32.totalorder %s222, %s223
    %p237 = scmp.eq.s32.totalorder %s21, 1
    %p238 = por %p236, %p237
    %p240 = scmp.ne.s32.totalorder %s223, %s239
    %p241 = scmp.eq.s32.totalorder %s21, 0
    %p242 = por %p240, %p241
    %p243 = scmp.le.s32.totalorder 1, %s15
    %p244 = scmp.lt.s32.totalorder %s15, 3
    %p245 = pnand %p243, %p244
    %p246 = pneg %p245
    // Predicated region
    $region9: #{tsoc_forward.1} parent=5 // pred_check
      _
    $region10: #{tsoc_forward.1} parent=5 // pred_check_branch
      %248 = sbr.rel (%p245) target = $region12
    $region11: #{tsoc_forward.1} parent=5 // pred_region
      %s249 = ssub.s32 %s15, 1
      // Predicated region
      $region13: #{tsoc_forward.1} parent=11 // pred_check
        %p250 = pneg %p62
      $region14: #{tsoc_forward.1} parent=11 // pred_check_branch
        %252 = sbr.rel (%p250) target = $region16
      $region15: #{tsoc_forward.1} parent=11 // pred_region
        _
      $region16: #{tsoc_forward.1} parent=11 // pred_fallthru
        _
      // Predicated region
      $region17: #{tsoc_forward.1} parent=11 // pred_check
        %p253 = pneg %p83
      $region18: #{tsoc_forward.1} parent=11 // pred_check_branch
        %255 = sbr.rel (%p253) target = $region20
      $region19: #{tsoc_forward.1} parent=11 // pred_region
        _
      $region20: #{tsoc_forward.1} parent=11 // pred_fallthru
        _
      // Predicated region
      $region21: #{tsoc_forward.1} parent=11 // pred_check
        %p256 = pneg %p104
      $region22: #{tsoc_forward.1} parent=11 // pred_check_branch
        %258 = sbr.rel (%p256) target = $region24
      $region23: #{tsoc_forward.1} parent=11 // pred_region
        _
      $region24: #{tsoc_forward.1} parent=11 // pred_fallthru
        _
      // Predicated region
      $region25: #{tsoc_forward.1} parent=11 // pred_check
        %p259 = pneg %p125
      $region26: #{tsoc_forward.1} parent=11 // pred_check_branch
        %261 = sbr.rel (%p259) target = $region28
      $region27: #{tsoc_forward.1} parent=11 // pred_region
        _
      $region28: #{tsoc_forward.1} parent=11 // pred_fallthru
        _
      // Predicated region
      $region29: #{tsoc_forward.1} parent=11 // pred_check
        %p262 = pneg %p146
      $region30: #{tsoc_forward.1} parent=11 // pred_check_branch
        %264 = sbr.rel (%p262) target = $region32
      $region31: #{tsoc_forward.1} parent=11 // pred_region
        _
      $region32: #{tsoc_forward.1} parent=11 // pred_fallthru
        _
      // Predicated region
      $region33: #{tsoc_forward.1} parent=11 // pred_check
        %p265 = pneg %p167
      $region34: #{tsoc_forward.1} parent=11 // pred_check_branch
        %267 = sbr.rel (%p265) target = $region36
      $region35: #{tsoc_forward.1} parent=11 // pred_region
        _
      $region36: #{tsoc_forward.1} parent=11 // pred_fallthru
        _
      // Predicated region
      $region37: #{tsoc_forward.1} parent=11 // pred_check
        %p268 = pneg %p188
      $region38: #{tsoc_forward.1} parent=11 // pred_check_branch
        %270 = sbr.rel (%p268) target = $region40
      $region39: #{tsoc_forward.1} parent=11 // pred_region
        _
      $region40: #{tsoc_forward.1} parent=11 // pred_fallthru
        _
      // Predicated region
      $region41: #{tsoc_forward.1} parent=11 // pred_check
        %p271 = pneg %p209
      $region42: #{tsoc_forward.1} parent=11 // pred_check_branch
        %273 = sbr.rel (%p271) target = $region44
      $region43: #{tsoc_forward.1} parent=11 // pred_region
        _
      $region44: #{tsoc_forward.1} parent=11 // pred_fallthru
        _
    $region12: #{tsoc_forward.1} parent=5 // pred_fallthru
      _
    %p274 = scmp.lt.s32.totalorder %s15, 2
    // Predicated region
    $region45: #{tsoc_forward.1} parent=5 // pred_check
      %p275 = pneg %p274
    $region46: #{tsoc_forward.1} parent=5 // pred_check_branch
      %277 = sbr.rel (%p275) target = $region48
    $region47: #{tsoc_forward.1} parent=5 // pred_region
      // Predicated region
      $region49: #{tsoc_forward.1} parent=47 // pred_check
        %p278 = pneg %p35
      $region50: #{tsoc_forward.1} parent=47 // pred_check_branch
        %280 = sbr.rel (%p278) target = $region52
      $region51: #{tsoc_forward.1} parent=47 // pred_region
        %s281 = smul.u32 32, %s15
        %p282 = scmp.lt.s32.totalorder %s281, 63
        %s283 = scalar_select %p282, %s281, 63
        %s284 = smul.addr %s283, 8
        %s285 = scalar_lea.vmem %s0, %s284
        %s286 = smul.u32 32, %s15
      $region52: #{tsoc_forward.1} parent=47 // pred_fallthru
        _
    $region48: #{tsoc_forward.1} parent=5 // pred_fallthru
      _
    %p287 = scmp.le.s32.totalorder 1, %s15
    %p288 = scmp.lt.s32.totalorder %s15, 3
    %p289 = pnand %p287, %p288
    %p290 = pneg %p289
    // Predicated region
    $region53: #{tsoc_forward.1} parent=5 // pred_check
      _
    $region54: #{tsoc_forward.1} parent=5 // pred_check_branch
      %292 = sbr.rel (%p289) target = $region56
    $region55: #{tsoc_forward.1} parent=5 // pred_region
      %s293 = ssub.s32 %s15, 1
      %s294 = smul.u32 32, %s20
      %p295 = scmp.lt.s32.totalorder %s294, 63
      %s296 = scalar_select %p295, %s294, 63
      %s297 = smul.addr %s296, 8
      %s298 = scalar_lea.vmem %s0, %s297
      %p299 = pneg %p41
      %p300 = pneg %p38
      %p301 = pneg %p62
      %p302 = pneg %p59
      %p303 = pneg %p83
      %p304 = pneg %p80
      %p305 = pneg %p104
      %p306 = pneg %p101
      %p307 = pneg %p125
      %p308 = pneg %p122
      %p309 = pneg %p146
      %p310 = pneg %p143
      %p311 = pneg %p167
      %p312 = pneg %p164
      %p313 = pneg %p188
      %p314 = pneg %p185
      %p315 = pneg %p209
      %p316 = pneg %p206
      %p317 = pneg %p235
      %p318 = pneg %p232
      %s319 = smul.u32 32, %s20
      %p320 = scmp.lt.s32.totalorder %s319, 63
      %s321 = scalar_select %p320, %s319, 63
      %s322 = smul.addr %s321, 4
      %s323 = scalar_lea.vmem %s9, %s322
      %s324 = smul.u32 32, %s20
      %p325 = scmp.lt.s32.totalorder %s324, 63
      %s326 = scalar_select %p325, %s324, 63
      %s327 = smul.addr %s326, 8
      %s328 = scalar_lea.vmem %s0, %s327
      %s329 = smul.u32 32, %s20
      %s330 = smul.u32 32, %s20
      %p331 = scmp.lt.s32.totalorder %s330, 63
      %s332 = scalar_select %p331, %s330, 63
      %s333 = smul.addr %s332, 4
      %s334 = scalar_lea.vmem %s9, %s333
      %s335 = smul.u32 32, %s20
      %v337 = vld [vmem:[%s328] sm:$0xff]
      %v338 = vld [vmem:[%s328 + $0x8] sm:$0xff]
      %v339 = vld [vmem:[%s328 + $0x10] sm:$0xff]
      %v340 = vld [vmem:[%s328 + $0x18] sm:$0xff]
      %v341 = vld [vmem:[%s328 + $0x20] sm:$0xff]
      %v342 = vld [vmem:[%s328 + $0x28] sm:$0xff]
      %v343 = vld [vmem:[%s328 + $0x30] sm:$0xff]
      %v344 = vld [vmem:[%s328 + $0x38] sm:$0xff]
      %v345 = vld [vmem:[%s328 + $0x40] sm:$0xff]
      %v346 = vld [vmem:[%s328 + $0x48] sm:$0xff]
      %v347 = vld [vmem:[%s328 + $0x50] sm:$0xff]
      %v348 = vld [vmem:[%s328 + $0x58] sm:$0xff]
      %v349 = vld [vmem:[%s328 + $0x60] sm:$0xff]
      %v350 = vld [vmem:[%s328 + $0x68] sm:$0xff]
      %v351 = vld [vmem:[%s328 + $0x70] sm:$0xff]
      %v352 = vld [vmem:[%s328 + $0x78] sm:$0xff]
      %v353 = vld [vmem:[%s328 + $0x80] sm:$0xff]
      %v354 = vld [vmem:[%s328 + $0x88] sm:$0xff]
      %v355 = vld [vmem:[%s328 + $0x90] sm:$0xff]
      %v356 = vld [vmem:[%s328 + $0x98] sm:$0xff]
      %v357 = vld [vmem:[%s328 + $0xa0] sm:$0xff]
      %v358 = vld [vmem:[%s328 + $0xa8] sm:$0xff]
      %v359 = vld [vmem:[%s328 + $0xb0] sm:$0xff]
      %v360 = vld [vmem:[%s328 + $0xb8] sm:$0xff]
      %v361 = vld [vmem:[%s328 + $0xc0] sm:$0xff]
      %v362 = vld [vmem:[%s328 + $0xc8] sm:$0xff]
      %v363 = vld [vmem:[%s328 + $0xd0] sm:$0xff]
      %v364 = vld [vmem:[%s328 + $0xd8] sm:$0xff]
      %v365 = vld [vmem:[%s328 + $0xe0] sm:$0xff]
      %v366 = vld [vmem:[%s328 + $0xe8] sm:$0xff]
      %v367 = vld [vmem:[%s328 + $0xf0] sm:$0xff]
      %v368 = vld [vmem:[%s328 + $0xf8] sm:$0xff]
      %v369 = vpack.c.bf16 %v338, %v337
      %v370 = vpack.c.bf16 %v340, %v339
      %v371 = vpack.c.bf16 %v342, %v341
      %v372 = vpack.c.bf16 %v344, %v343
      %v373 = vpack.c.bf16 %v346, %v345
      %v374 = vpack.c.bf16 %v348, %v347
      %v375 = vpack.c.bf16 %v350, %v349
      %v376 = vpack.c.bf16 %v352, %v351
      %v377 = vpack.c.bf16 %v354, %v353
      %v378 = vpack.c.bf16 %v356, %v355
      %v379 = vpack.c.bf16 %v358, %v357
      %v380 = vpack.c.bf16 %v360, %v359
      %v381 = vpack.c.bf16 %v362, %v361
      %v382 = vpack.c.bf16 %v364, %v363
      %v383 = vpack.c.bf16 %v366, %v365
      %v384 = vpack.c.bf16 %v368, %v367
      %v385 = vld [vmem:[%s1] sm:$0xf]
      %v386 = vld [vmem:[%s1 + $0x4] sm:$0xf]
      %v387 = vld [vmem:[%s1 + $0x8] sm:$0xf]
      %v388 = vld [vmem:[%s1 + $0xc] sm:$0xf]
      %v389 = vld [vmem:[%s2] sm:$0x1]
      %v391 = vlaneseq
      %v392 = vshrl.u32 %v391, 7
      %v393 = vsub.s32 0, %v392
      %v394 = vrot.slane %v389, %v393
      %v400 = vunpack.c.l.b16 %v385
      %v401 = vunpack.c.l.b16 %v386
      %v402 = vunpack.c.l.b16 %v387
      %v403 = vunpack.c.l.b16 %v388
      %v404 = vpack.c.b16 %v401, %v400
      %v405 = vpack.c.b16 %v403, %v402
      %vm408 = vcmask 261120
      %v410 = vsel %vm408, %v369, 0
      %v413 = vsel %vm408, %v370, 0
      %v416 = vsel %vm408, %v371, 0
      %v419 = vsel %vm408, %v372, 0
      %v422 = vsel %vm408, %v373, 0
      %v425 = vsel %vm408, %v374, 0
      %v428 = vsel %vm408, %v375, 0
      %v431 = vsel %vm408, %v376, 0
      %v434 = vsel %vm408, %v377, 0
      %v437 = vsel %vm408, %v378, 0
      %v440 = vsel %vm408, %v379, 0
      %v443 = vsel %vm408, %v380, 0
      %v446 = vsel %vm408, %v381, 0
      %v449 = vsel %vm408, %v382, 0
      %v452 = vsel %vm408, %v383, 0
      %v455 = vsel %vm408, %v384, 0
      %457 = vmatprep.subr.bf16.mxu0 0
      %458 = vmatpush1.bf16.msra.mxu0 %v404
      %459 = vmatprep.subr.bf16.mxu0 0
      %460 = vmatpush1.bf16.msra.mxu0 %v405
      %461 = vmatprep.subr.bf16.mxu0 0
      %462 = vmatpush1.bf16.msra.mxu0 0
      %463 = vmatprep.subr.bf16.mxu0 0
      %464 = vmatpush1.bf16.msra.mxu0 0
      %465 = vmatprep.subr.bf16.mxu0 0
      %466 = vmatpush1.bf16.msra.mxu0 0
      %467 = vmatprep.subr.bf16.mxu0 0
      %468 = vmatpush1.bf16.msra.mxu0 0
      %469 = vmatprep.subr.bf16.mxu0 0
      %470 = vmatpush1.bf16.msra.mxu0 0
      %471 = vmatprep.subr.bf16.mxu0 0
      %472 = vmatpush1.bf16.msra.mxu0 0
      %473 = vmatprep.subr.bf16.mxu0 0
      %474 = vmatpush1.bf16.msra.mxu0 0
      %475 = vmatprep.subr.bf16.mxu0 0
      %476 = vmatpush1.bf16.msra.mxu0 0
      %477 = vmatprep.subr.bf16.mxu0 0
      %478 = vmatpush1.bf16.msra.mxu0 0
      %479 = vmatprep.subr.bf16.mxu0 0
      %480 = vmatpush1.bf16.msra.mxu0 0
      %481 = vmatprep.subr.bf16.mxu0 0
      %482 = vmatpush1.bf16.msra.mxu0 0
      %483 = vmatprep.subr.bf16.mxu0 0
      %484 = vmatpush1.bf16.msra.mxu0 0
      %485 = vmatprep.subr.bf16.mxu0 0
      %486 = vmatpush1.bf16.msra.mxu0 0
      %487 = vmatprep.subr.bf16.mxu0 0
      %488 = vmatpush1.bf16.msra.mxu0 0
      %489 = vmatprep.mubr.bf16.mxu0 0
      %490 = vmatmul.mubr.bf16.gmra.mrb[0].mxu0 %v410
      %v491 = vpop.f32.mrb[0].mxu0
      %v492 = vadd.f32 %v394, %v491
      %v493 = vpop.f32.mrb[0].mxu0
      %v494 = vpop.f32.mrb[0].mxu0
      %v495 = vadd.f32 %v394, %v494
      %v496 = vpop.f32.mrb[0].mxu0
      %497 = vmatprep.mubr.bf16.mxu0 0
      %498 = vmatmul.mubr.bf16.gmra.mrb[0].mxu0 %v413
      %v499 = vpop.f32.mrb[0].mxu0
      %v500 = vadd.f32 %v394, %v499
      %v501 = vpop.f32.mrb[0].mxu0
      %v502 = vpop.f32.mrb[0].mxu0
      %v503 = vadd.f32 %v394, %v502
      %v504 = vpop.f32.mrb[0].mxu0
      %505 = vmatprep.mubr.bf16.mxu0 0
      %506 = vmatmul.mubr.bf16.gmra.mrb[0].mxu0 %v416
      %v507 = vpop.f32.mrb[0].mxu0
      %v508 = vadd.f32 %v394, %v507
      %v509 = vpop.f32.mrb[0].mxu0
      %v510 = vpop.f32.mrb[0].mxu0
      %v511 = vadd.f32 %v394, %v510
      %v512 = vpop.f32.mrb[0].mxu0
      %513 = vmatprep.mubr.bf16.mxu0 0
      %514 = vmatmul.mubr.bf16.gmra.mrb[0].mxu0 %v419
      %v515 = vpop.f32.mrb[0].mxu0
      %v516 = vadd.f32 %v394, %v515
      %v517 = vpop.f32.mrb[0].mxu0
      %v518 = vpop.f32.mrb[0].mxu0
      %v519 = vadd.f32 %v394, %v518
      %v520 = vpop.f32.mrb[0].mxu0
      %521 = vmatprep.mubr.bf16.mxu0 0
      %522 = vmatmul.mubr.bf16.gmra.mrb[0].mxu0 %v422
      %v523 = vpop.f32.mrb[0].mxu0
      %v524 = vadd.f32 %v394, %v523
      %v525 = vpop.f32.mrb[0].mxu0
      %v526 = vpop.f32.mrb[0].mxu0
      %v527 = vadd.f32 %v394, %v526
      %v528 = vpop.f32.mrb[0].mxu0
      %529 = vmatprep.mubr.bf16.mxu0 0
      %530 = vmatmul.mubr.bf16.gmra.mrb[0].mxu0 %v425
      %v531 = vpop.f32.mrb[0].mxu0
      %v532 = vadd.f32 %v394, %v531
      %v533 = vpop.f32.mrb[0].mxu0
      %v534 = vpop.f32.mrb[0].mxu0
      %v535 = vadd.f32 %v394, %v534
      %v536 = vpop.f32.mrb[0].mxu0
      %537 = vmatprep.mubr.bf16.mxu0 0
      %538 = vmatmul.mubr.bf16.gmra.mrb[0].mxu0 %v428
      %v539 = vpop.f32.mrb[0].mxu0
      %v540 = vadd.f32 %v394, %v539
      %v541 = vpop.f32.mrb[0].mxu0
      %v542 = vpop.f32.mrb[0].mxu0
      %v543 = vadd.f32 %v394, %v542
      %v544 = vpop.f32.mrb[0].mxu0
      %545 = vmatprep.mubr.bf16.mxu0 0
      %546 = vmatmul.mubr.bf16.gmra.mrb[0].mxu0 %v431
      %v547 = vpop.f32.mrb[0].mxu0
      %v548 = vadd.f32 %v394, %v547
      %v549 = vpop.f32.mrb[0].mxu0
      %v550 = vpop.f32.mrb[0].mxu0
      %v551 = vadd.f32 %v394, %v550
      %v552 = vpop.f32.mrb[0].mxu0
      %553 = vmatprep.mubr.bf16.mxu0 0
      %554 = vmatmul.mubr.bf16.gmra.mrb[0].mxu0 %v434
      %v555 = vpop.f32.mrb[0].mxu0
      %v556 = vadd.f32 %v394, %v555
      %v557 = vpop.f32.mrb[0].mxu0
      %v558 = vpop.f32.mrb[0].mxu0
      %v559 = vadd.f32 %v394, %v558
      %v560 = vpop.f32.mrb[0].mxu0
      %561 = vmatprep.mubr.bf16.mxu0 0
      %562 = vmatmul.mubr.bf16.gmra.mrb[0].mxu0 %v437
      %v563 = vpop.f32.mrb[0].mxu0
      %v564 = vadd.f32 %v394, %v563
      %v565 = vpop.f32.mrb[0].mxu0
      %v566 = vpop.f32.mrb[0].mxu0
      %v567 = vadd.f32 %v394, %v566
      %v568 = vpop.f32.mrb[0].mxu0
      %569 = vmatprep.mubr.bf16.mxu0 0
      %570 = vmatmul.mubr.bf16.gmra.mrb[0].mxu0 %v440
      %v571 = vpop.f32.mrb[0].mxu0
      %v572 = vadd.f32 %v394, %v571
      %v573 = vpop.f32.mrb[0].mxu0
      %v574 = vpop.f32.mrb[0].mxu0
      %v575 = vadd.f32 %v394, %v574
      %v576 = vpop.f32.mrb[0].mxu0
      %577 = vmatprep.mubr.bf16.mxu0 0
      %578 = vmatmul.mubr.bf16.gmra.mrb[0].mxu0 %v443
      %v579 = vpop.f32.mrb[0].mxu0
      %v580 = vadd.f32 %v394, %v579
      %v581 = vpop.f32.mrb[0].mxu0
      %v582 = vpop.f32.mrb[0].mxu0
      %v583 = vadd.f32 %v394, %v582
      %v584 = vpop.f32.mrb[0].mxu0
      %585 = vmatprep.mubr.bf16.mxu0 0
      %586 = vmatmul.mubr.bf16.gmra.mrb[0].mxu0 %v446
      %v587 = vpop.f32.mrb[0].mxu0
      %v588 = vadd.f32 %v394, %v587
      %v589 = vpop.f32.mrb[0].mxu0
      %v590 = vpop.f32.mrb[0].mxu0
      %v591 = vadd.f32 %v394, %v590
      %v592 = vpop.f32.mrb[0].mxu0
      %593 = vmatprep.mubr.bf16.mxu0 0
      %594 = vmatmul.mubr.bf16.gmra.mrb[0].mxu0 %v449
      %v595 = vpop.f32.mrb[0].mxu0
      %v596 = vadd.f32 %v394, %v595
      %v597 = vpop.f32.mrb[0].mxu0
      %v598 = vpop.f32.mrb[0].mxu0
      %v599 = vadd.f32 %v394, %v598
      %v600 = vpop.f32.mrb[0].mxu0
      %601 = vmatprep.mubr.bf16.mxu0 0
      %602 = vmatmul.mubr.bf16.gmra.mrb[0].mxu0 %v452
      %v603 = vpop.f32.mrb[0].mxu0
      %v604 = vadd.f32 %v394, %v603
      %v605 = vpop.f32.mrb[0].mxu0
      %v606 = vpop.f32.mrb[0].mxu0
      %v607 = vadd.f32 %v394, %v606
      %v608 = vpop.f32.mrb[0].mxu0
      %609 = vmatprep.mubr.bf16.mxu0 0
      %610 = vmatmul.mubr.bf16.gmra.mrb[0].mxu0 %v455
      %v611 = vpop.f32.mrb[0].mxu0
      %v612 = vadd.f32 %v394, %v611
      %v613 = vpop.f32.mrb[0].mxu0
      %v614 = vpop.f32.mrb[0].mxu0
      %v615 = vadd.f32 %v394, %v614
      %v616 = vpop.f32.mrb[0].mxu0
      %617 = vdwg.mxu0
      %v618 = vmax.f32 %v492, 0.0
      %v619 = vmax.f32 %v495, 0.0
      %v620 = vmax.f32 %v500, 0.0
      %v621 = vmax.f32 %v503, 0.0
      %v622 = vmax.f32 %v508, 0.0
      %v623 = vmax.f32 %v511, 0.0
      %v624 = vmax.f32 %v516, 0.0
      %v625 = vmax.f32 %v519, 0.0
      %v626 = vmax.f32 %v524, 0.0
      %v627 = vmax.f32 %v527, 0.0
      %v628 = vmax.f32 %v532, 0.0
      %v629 = vmax.f32 %v535, 0.0
      %v630 = vmax.f32 %v540, 0.0
      %v631 = vmax.f32 %v543, 0.0
      %v632 = vmax.f32 %v548, 0.0
      %v633 = vmax.f32 %v551, 0.0
      %v634 = vmax.f32 %v556, 0.0
      %v635 = vmax.f32 %v559, 0.0
      %v636 = vmax.f32 %v564, 0.0
      %v637 = vmax.f32 %v567, 0.0
      %v638 = vmax.f32 %v572, 0.0
      %v639 = vmax.f32 %v575, 0.0
      %v640 = vmax.f32 %v580, 0.0
      %v641 = vmax.f32 %v583, 0.0
      %v642 = vmax.f32 %v588, 0.0
      %v643 = vmax.f32 %v591, 0.0
      %v644 = vmax.f32 %v596, 0.0
      %v645 = vmax.f32 %v599, 0.0
      %v646 = vmax.f32 %v604, 0.0
      %v647 = vmax.f32 %v607, 0.0
      %v648 = vmax.f32 %v612, 0.0
      %v649 = vmax.f32 %v615, 0.0
      %v650 = vpack.c.bf16 %v619, %v618
      %v651 = vpack.c.bf16 %v621, %v620
      %v652 = vpack.c.bf16 %v623, %v622
      %v653 = vpack.c.bf16 %v625, %v624
      %v654 = vpack.c.bf16 %v627, %v626
      %v655 = vpack.c.bf16 %v629, %v628
      %v656 = vpack.c.bf16 %v631, %v630
      %v657 = vpack.c.bf16 %v633, %v632
      %v658 = vpack.c.bf16 %v635, %v634
      %v659 = vpack.c.bf16 %v637, %v636
      %v660 = vpack.c.bf16 %v639, %v638
      %v661 = vpack.c.bf16 %v641, %v640
      %v662 = vpack.c.bf16 %v643, %v642
      %v663 = vpack.c.bf16 %v645, %v644
      %v664 = vpack.c.bf16 %v647, %v646
      %v665 = vpack.c.bf16 %v649, %v648
      %v666 = vld [vmem:[%s3] sm:$0xf]
      %v667 = vld [vmem:[%s3 + $0x4] sm:$0xf]
      %v668 = vld [vmem:[%s3 + $0x8] sm:$0xf]
      %v669 = vld [vmem:[%s3 + $0xc] sm:$0xf]
      %v670 = vld [vmem:[%s3 + $0x10] sm:$0xf]
      %v671 = vld [vmem:[%s3 + $0x14] sm:$0xf]
      %v672 = vld [vmem:[%s3 + $0x18] sm:$0xf]
      %v673 = vld [vmem:[%s3 + $0x1c] sm:$0xf]
      %v674 = vld [vmem:[%s3 + $0x20] sm:$0xf]
      %v675 = vld [vmem:[%s3 + $0x24] sm:$0xf]
      %v676 = vld [vmem:[%s3 + $0x28] sm:$0xf]
      %v677 = vld [vmem:[%s3 + $0x2c] sm:$0xf]
      %v678 = vld [vmem:[%s3 + $0x30] sm:$0xf]
      %v679 = vld [vmem:[%s3 + $0x34] sm:$0xf]
      %v680 = vld [vmem:[%s3 + $0x38] sm:$0xf]
      %v681 = vld [vmem:[%s3 + $0x3c] sm:$0xf]
      %v682 = vld [vmem:[%s4] sm:$0x1]
      %v684 = vlaneseq
      %v685 = vshrl.u32 %v684, 7
      %v686 = vsub.s32 0, %v685
      %v687 = vrot.slane %v682, %v686
      %v705 = vunpack.c.l.b16 %v666
      %v706 = vunpack.c.l.b16 %v667
      %v707 = vunpack.c.l.b16 %v668
      %v708 = vunpack.c.l.b16 %v669
      %v709 = vunpack.c.l.b16 %v670
      %v710 = vunpack.c.l.b16 %v671
      %v711 = vunpack.c.l.b16 %v672
      %v712 = vunpack.c.l.b16 %v673
      %v713 = vunpack.c.l.b16 %v674
      %v714 = vunpack.c.l.b16 %v675
      %v715 = vunpack.c.l.b16 %v676
      %v716 = vunpack.c.l.b16 %v677
      %v717 = vunpack.c.l.b16 %v678
      %v718 = vunpack.c.l.b16 %v679
      %v719 = vunpack.c.l.b16 %v680
      %v720 = vunpack.c.l.b16 %v681
      %v721 = vpack.c.b16 %v706, %v705
      %v722 = vpack.c.b16 %v708, %v707
      %v723 = vpack.c.b16 %v710, %v709
      %v724 = vpack.c.b16 %v712, %v711
      %v725 = vpack.c.b16 %v714, %v713
      %v726 = vpack.c.b16 %v716, %v715
      %v727 = vpack.c.b16 %v718, %v717
      %v728 = vpack.c.b16 %v720, %v719
      %737 = vmatprep.subr.bf16.mxu0 0
      %738 = vmatpush1.bf16.msra.mxu0 %v721
      %739 = vmatprep.subr.bf16.mxu0 0
      %740 = vmatpush1.bf16.msra.mxu0 %v722
      %741 = vmatprep.subr.bf16.mxu0 0
      %742 = vmatpush1.bf16.msra.mxu0 %v723
      %743 = vmatprep.subr.bf16.mxu0 0
      %744 = vmatpush1.bf16.msra.mxu0 %v724
      %745 = vmatprep.subr.bf16.mxu0 0
      %746 = vmatpush1.bf16.msra.mxu0 %v725
      %747 = vmatprep.subr.bf16.mxu0 0
      %748 = vmatpush1.bf16.msra.mxu0 %v726
      %749 = vmatprep.subr.bf16.mxu0 0
      %750 = vmatpush1.bf16.msra.mxu0 %v727
      %751 = vmatprep.subr.bf16.mxu0 0
      %752 = vmatpush1.bf16.msra.mxu0 %v728
      %753 = vmatprep.subr.bf16.mxu0 0
      %754 = vmatpush1.bf16.msra.mxu0 0
      %755 = vmatprep.subr.bf16.mxu0 0
      %756 = vmatpush1.bf16.msra.mxu0 0
      %757 = vmatprep.subr.bf16.mxu0 0
      %758 = vmatpush1.bf16.msra.mxu0 0
      %759 = vmatprep.subr.bf16.mxu0 0
      %760 = vmatpush1.bf16.msra.mxu0 0
      %761 = vmatprep.subr.bf16.mxu0 0
      %762 = vmatpush1.bf16.msra.mxu0 0
      %763 = vmatprep.subr.bf16.mxu0 0
      %764 = vmatpush1.bf16.msra.mxu0 0
      %765 = vmatprep.subr.bf16.mxu0 0
      %766 = vmatpush1.bf16.msra.mxu0 0
      %767 = vmatprep.subr.bf16.mxu0 0
      %768 = vmatpush1.bf16.msra.mxu0 0
      %769 = vmatprep.mubr.bf16.mxu0 0
      %770 = vmatmul.mubr.bf16.gmra.mrb[0].mxu0 %v650
      %v771 = vpop.f32.mrb[0].mxu0
      %v772 = vadd.f32 %v687, %v771
      %v773 = vpop.f32.mrb[0].mxu0
      %v774 = vpop.f32.mrb[0].mxu0
      %v775 = vadd.f32 %v687, %v774
      %v776 = vpop.f32.mrb[0].mxu0
      %777 = vmatprep.mubr.bf16.mxu0 0
      %778 = vmatmul.mubr.bf16.gmra.mrb[0].mxu0 %v651
      %v779 = vpop.f32.mrb[0].mxu0
      %v780 = vadd.f32 %v687, %v779
      %v781 = vpop.f32.mrb[0].mxu0
      %v782 = vpop.f32.mrb[0].mxu0
      %v783 = vadd.f32 %v687, %v782
      %v784 = vpop.f32.mrb[0].mxu0
      %785 = vmatprep.mubr.bf16.mxu0 0
      %786 = vmatmul.mubr.bf16.gmra.mrb[0].mxu0 %v652
      %v787 = vpop.f32.mrb[0].mxu0
      %v788 = vadd.f32 %v687, %v787
      %v789 = vpop.f32.mrb[0].mxu0
      %v790 = vpop.f32.mrb[0].mxu0
      %v791 = vadd.f32 %v687, %v790
      %v792 = vpop.f32.mrb[0].mxu0
      %793 = vmatprep.mubr.bf16.mxu0 0
      %794 = vmatmul.mubr.bf16.gmra.mrb[0].mxu0 %v653
      %v795 = vpop.f32.mrb[0].mxu0
      %v796 = vadd.f32 %v687, %v795
      %v797 = vpop.f32.mrb[0].mxu0
      %v798 = vpop.f32.mrb[0].mxu0
      %v799 = vadd.f32 %v687, %v798
      %v800 = vpop.f32.mrb[0].mxu0
      %801 = vmatprep.mubr.bf16.mxu0 0
      %802 = vmatmul.mubr.bf16.gmra.mrb[0].mxu0 %v654
      %v803 = vpop.f32.mrb[0].mxu0
      %v804 = vadd.f32 %v687, %v803
      %v805 = vpop.f32.mrb[0].mxu0
      %v806 = vpop.f32.mrb[0].mxu0
      %v807 = vadd.f32 %v687, %v806
      %v808 = vpop.f32.mrb[0].mxu0
      %809 = vmatprep.mubr.bf16.mxu0 0
      %810 = vmatmul.mubr.bf16.gmra.mrb[0].mxu0 %v655
      %v811 = vpop.f32.mrb[0].mxu0
      %v812 = vadd.f32 %v687, %v811
      %v813 = vpop.f32.mrb[0].mxu0
      %v814 = vpop.f32.mrb[0].mxu0
      %v815 = vadd.f32 %v687, %v814
      %v816 = vpop.f32.mrb[0].mxu0
      %817 = vmatprep.mubr.bf16.mxu0 0
      %818 = vmatmul.mubr.bf16.gmra.mrb[0].mxu0 %v656
      %v819 = vpop.f32.mrb[0].mxu0
      %v820 = vadd.f32 %v687, %v819
      %v821 = vpop.f32.mrb[0].mxu0
      %v822 = vpop.f32.mrb[0].mxu0
      %v823 = vadd.f32 %v687, %v822
      %v824 = vpop.f32.mrb[0].mxu0
      %825 = vmatprep.mubr.bf16.mxu0 0
      %826 = vmatmul.mubr.bf16.gmra.mrb[0].mxu0 %v657
      %v827 = vpop.f32.mrb[0].mxu0
      %v828 = vadd.f32 %v687, %v827
      %v829 = vpop.f32.mrb[0].mxu0
      %v830 = vpop.f32.mrb[0].mxu0
      %v831 = vadd.f32 %v687, %v830
      %v832 = vpop.f32.mrb[0].mxu0
      %833 = vmatprep.mubr.bf16.mxu0 0
      %834 = vmatmul.mubr.bf16.gmra.mrb[0].mxu0 %v658
      %v835 = vpop.f32.mrb[0].mxu0
      %v836 = vadd.f32 %v687, %v835
      %v837 = vpop.f32.mrb[0].mxu0
      %v838 = vpop.f32.mrb[0].mxu0
      %v839 = vadd.f32 %v687, %v838
      %v840 = vpop.f32.mrb[0].mxu0
      %841 = vmatprep.mubr.bf16.mxu0 0
      %842 = vmatmul.mubr.bf16.gmra.mrb[0].mxu0 %v659
      %v843 = vpop.f32.mrb[0].mxu0
      %v844 = vadd.f32 %v687, %v843
      %v845 = vpop.f32.mrb[0].mxu0
      %v846 = vpop.f32.mrb[0].mxu0
      %v847 = vadd.f32 %v687, %v846
      %v848 = vpop.f32.mrb[0].mxu0
      %849 = vmatprep.mubr.bf16.mxu0 0
      %850 = vmatmul.mubr.bf16.gmra.mrb[0].mxu0 %v660
      %v851 = vpop.f32.mrb[0].mxu0
      %v852 = vadd.f32 %v687, %v851
      %v853 = vpop.f32.mrb[0].mxu0
      %v854 = vpop.f32.mrb[0].mxu0
      %v855 = vadd.f32 %v687, %v854
      %v856 = vpop.f32.mrb[0].mxu0
      %857 = vmatprep.mubr.bf16.mxu0 0
      %858 = vmatmul.mubr.bf16.gmra.mrb[0].mxu0 %v661
      %v859 = vpop.f32.mrb[0].mxu0
      %v860 = vadd.f32 %v687, %v859
      %v861 = vpop.f32.mrb[0].mxu0
      %v862 = vpop.f32.mrb[0].mxu0
      %v863 = vadd.f32 %v687, %v862
      %v864 = vpop.f32.mrb[0].mxu0
      %865 = vmatprep.mubr.bf16.mxu0 0
      %866 = vmatmul.mubr.bf16.gmra.mrb[0].mxu0 %v662
      %v867 = vpop.f32.mrb[0].mxu0
      %v868 = vadd.f32 %v687, %v867
      %v869 = vpop.f32.mrb[0].mxu0
      %v870 = vpop.f32.mrb[0].mxu0
      %v871 = vadd.f32 %v687, %v870
      %v872 = vpop.f32.mrb[0].mxu0
      %873 = vmatprep.mubr.bf16.mxu0 0
      %874 = vmatmul.mubr.bf16.gmra.mrb[0].mxu0 %v663
      %v875 = vpop.f32.mrb[0].mxu0
      %v876 = vadd.f32 %v687, %v875
      %v877 = vpop.f32.mrb[0].mxu0
      %v878 = vpop.f32.mrb[0].mxu0
      %v879 = vadd.f32 %v687, %v878
      %v880 = vpop.f32.mrb[0].mxu0
      %881 = vmatprep.mubr.bf16.mxu0 0
      %882 = vmatmul.mubr.bf16.gmra.mrb[0].mxu0 %v664
      %v883 = vpop.f32.mrb[0].mxu0
      %v884 = vadd.f32 %v687, %v883
      %v885 = vpop.f32.mrb[0].mxu0
      %v886 = vpop.f32.mrb[0].mxu0
      %v887 = vadd.f32 %v687, %v886
      %v888 = vpop.f32.mrb[0].mxu0
      %889 = vmatprep.mubr.bf16.mxu0 0
      %890 = vmatmul.mubr.bf16.gmra.mrb[0].mxu0 %v665
      %v891 = vpop.f32.mrb[0].mxu0
      %v892 = vadd.f32 %v687, %v891
      %v893 = vpop.f32.mrb[0].mxu0
      %v894 = vpop.f32.mrb[0].mxu0
      %v895 = vadd.f32 %v687, %v894
      %v896 = vpop.f32.mrb[0].mxu0
      %897 = vdwg.mxu0
      %v898 = vmax.f32 %v772, 0.0
      %v899 = vmax.f32 %v775, 0.0
      %v900 = vmax.f32 %v780, 0.0
      %v901 = vmax.f32 %v783, 0.0
      %v902 = vmax.f32 %v788, 0.0
      %v903 = vmax.f32 %v791, 0.0
      %v904 = vmax.f32 %v796, 0.0
      %v905 = vmax.f32 %v799, 0.0
      %v906 = vmax.f32 %v804, 0.0
      %v907 = vmax.f32 %v807, 0.0
      %v908 = vmax.f32 %v812, 0.0
      %v909 = vmax.f32 %v815, 0.0
      %v910 = vmax.f32 %v820, 0.0
      %v911 = vmax.f32 %v823, 0.0
      %v912 = vmax.f32 %v828, 0.0
      %v913 = vmax.f32 %v831, 0.0
      %v914 = vmax.f32 %v836, 0.0
      %v915 = vmax.f32 %v839, 0.0
      %v916 = vmax.f32 %v844, 0.0
      %v917 = vmax.f32 %v847, 0.0
      %v918 = vmax.f32 %v852, 0.0
      %v919 = vmax.f32 %v855, 0.0
      %v920 = vmax.f32 %v860, 0.0
      %v921 = vmax.f32 %v863, 0.0
      %v922 = vmax.f32 %v868, 0.0
      %v923 = vmax.f32 %v871, 0.0
      %v924 = vmax.f32 %v876, 0.0
      %v925 = vmax.f32 %v879, 0.0
      %v926 = vmax.f32 %v884, 0.0
      %v927 = vmax.f32 %v887, 0.0
      %v928 = vmax.f32 %v892, 0.0
      %v929 = vmax.f32 %v895, 0.0
      %v930 = vpack.c.bf16 %v899, %v898
      %v931 = vpack.c.bf16 %v901, %v900
      %v932 = vpack.c.bf16 %v903, %v902
      %v933 = vpack.c.bf16 %v905, %v904
      %v934 = vpack.c.bf16 %v907, %v906
      %v935 = vpack.c.bf16 %v909, %v908
      %v936 = vpack.c.bf16 %v911, %v910
      %v937 = vpack.c.bf16 %v913, %v912
      %v938 = vpack.c.bf16 %v915, %v914
      %v939 = vpack.c.bf16 %v917, %v916
      %v940 = vpack.c.bf16 %v919, %v918
      %v941 = vpack.c.bf16 %v921, %v920
      %v942 = vpack.c.bf16 %v923, %v922
      %v943 = vpack.c.bf16 %v925, %v924
      %v944 = vpack.c.bf16 %v927, %v926
      %v945 = vpack.c.bf16 %v929, %v928
      %v946 = vld [vmem:[%s5] sm:$0xf]
      %v947 = vld [vmem:[%s5 + $0x4] sm:$0xf]
      %v948 = vld [vmem:[%s5 + $0x8] sm:$0xf]
      %v949 = vld [vmem:[%s5 + $0xc] sm:$0xf]
      %v950 = vld [vmem:[%s5 + $0x10] sm:$0xf]
      %v951 = vld [vmem:[%s5 + $0x14] sm:$0xf]
      %v952 = vld [vmem:[%s5 + $0x18] sm:$0xf]
      %v953 = vld [vmem:[%s5 + $0x1c] sm:$0xf]
      %v954 = vld [vmem:[%s5 + $0x20] sm:$0xf]
      %v955 = vld [vmem:[%s5 + $0x24] sm:$0xf]
      %v956 = vld [vmem:[%s5 + $0x28] sm:$0xf]
      %v957 = vld [vmem:[%s5 + $0x2c] sm:$0xf]
      %v958 = vld [vmem:[%s5 + $0x30] sm:$0xf]
      %v959 = vld [vmem:[%s5 + $0x34] sm:$0xf]
      %v960 = vld [vmem:[%s5 + $0x38] sm:$0xf]
      %v961 = vld [vmem:[%s5 + $0x3c] sm:$0xf]
      %v962 = vld [vmem:[%s6] sm:$0x1]
      %v964 = vlaneseq
      %v965 = vshrl.u32 %v964, 7
      %v966 = vsub.s32 0, %v965
      %v967 = vrot.slane %v962, %v966
      %v985 = vunpack.c.l.b16 %v946
      %v986 = vunpack.c.l.b16 %v947
      %v987 = vunpack.c.l.b16 %v948
      %v988 = vunpack.c.l.b16 %v949
      %v989 = vunpack.c.l.b16 %v950
      %v990 = vunpack.c.l.b16 %v951
      %v991 = vunpack.c.l.b16 %v952
      %v992 = vunpack.c.l.b16 %v953
      %v993 = vunpack.c.l.b16 %v954
      %v994 = vunpack.c.l.b16 %v955
      %v995 = vunpack.c.l.b16 %v956
      %v996 = vunpack.c.l.b16 %v957
      %v997 = vunpack.c.l.b16 %v958
      %v998 = vunpack.c.l.b16 %v959
      %v999 = vunpack.c.l.b16 %v960
      %v1000 = vunpack.c.l.b16 %v961
      %v1001 = vpack.c.b16 %v986, %v985
      %v1002 = vpack.c.b16 %v988, %v987
      %v1003 = vpack.c.b16 %v990, %v989
      %v1004 = vpack.c.b16 %v992, %v991
      %v1005 = vpack.c.b16 %v994, %v993
      %v1006 = vpack.c.b16 %v996, %v995
      %v1007 = vpack.c.b16 %v998, %v997
      %v1008 = vpack.c.b16 %v1000, %v999
      %1017 = vmatprep.subr.bf16.mxu0 0
      %1018 = vmatpush1.bf16.msra.mxu0 %v1001
      %1019 = vmatprep.subr.bf16.mxu0 0
      %1020 = vmatpush1.bf16.msra.mxu0 %v1002
      %1021 = vmatprep.subr.bf16.mxu0 0
      %1022 = vmatpush1.bf16.msra.mxu0 %v1003
      %1023 = vmatprep.subr.bf16.mxu0 0
      %1024 = vmatpush1.bf16.msra.mxu0 %v1004
      %1025 = vmatprep.subr.bf16.mxu0 0
      %1026 = vmatpush1.bf16.msra.mxu0 %v1005
      %1027 = vmatprep.subr.bf16.mxu0 0
      %1028 = vmatpush1.bf16.msra.mxu0 %v1006
      %1029 = vmatprep.subr.bf16.mxu0 0
      %1030 = vmatpush1.bf16.msra.mxu0 %v1007
      %1031 = vmatprep.subr.bf16.mxu0 0
      %1032 = vmatpush1.bf16.msra.mxu0 %v1008
      %1033 = vmatprep.subr.bf16.mxu0 0
      %1034 = vmatpush1.bf16.msra.mxu0 0
      %1035 = vmatprep.subr.bf16.mxu0 0
      %1036 = vmatpush1.bf16.msra.mxu0 0
      %1037 = vmatprep.subr.bf16.mxu0 0
      %1038 = vmatpush1.bf16.msra.mxu0 0
      %1039 = vmatprep.subr.bf16.mxu0 0
      %1040 = vmatpush1.bf16.msra.mxu0 0
      %1041 = vmatprep.subr.bf16.mxu0 0
      %1042 = vmatpush1.bf16.msra.mxu0 0
      %1043 = vmatprep.subr.bf16.mxu0 0
      %1044 = vmatpush1.bf16.msra.mxu0 0
      %1045 = vmatprep.subr.bf16.mxu0 0
      %1046 = vmatpush1.bf16.msra.mxu0 0
      %1047 = vmatprep.subr.bf16.mxu0 0
      %1048 = vmatpush1.bf16.msra.mxu0 0
      %1049 = vmatprep.mubr.bf16.mxu0 0
      %1050 = vmatmul.mubr.bf16.gmra.mrb[0].mxu0 %v930
      %v1051 = vpop.f32.mrb[0].mxu0
      %v1052 = vadd.f32 %v967, %v1051
      %v1053 = vpop.f32.mrb[0].mxu0
      %v1054 = vpop.f32.mrb[0].mxu0
      %v1055 = vadd.f32 %v967, %v1054
      %v1056 = vpop.f32.mrb[0].mxu0
      %1057 = vmatprep.mubr.bf16.mxu0 0
      %1058 = vmatmul.mubr.bf16.gmra.mrb[0].mxu0 %v931
      %v1059 = vpop.f32.mrb[0].mxu0
      %v1060 = vadd.f32 %v967, %v1059
      %v1061 = vpop.f32.mrb[0].mxu0
      %v1062 = vpop.f32.mrb[0].mxu0
      %v1063 = vadd.f32 %v967, %v1062
      %v1064 = vpop.f32.mrb[0].mxu0
      %1065 = vmatprep.mubr.bf16.mxu0 0
      %1066 = vmatmul.mubr.bf16.gmra.mrb[0].mxu0 %v932
      %v1067 = vpop.f32.mrb[0].mxu0
      %v1068 = vadd.f32 %v967, %v1067
      %v1069 = vpop.f32.mrb[0].mxu0
      %v1070 = vpop.f32.mrb[0].mxu0
      %v1071 = vadd.f32 %v967, %v1070
      %v1072 = vpop.f32.mrb[0].mxu0
      %1073 = vmatprep.mubr.bf16.mxu0 0
      %1074 = vmatmul.mubr.bf16.gmra.mrb[0].mxu0 %v933
      %v1075 = vpop.f32.mrb[0].mxu0
      %v1076 = vadd.f32 %v967, %v1075
      %v1077 = vpop.f32.mrb[0].mxu0
      %v1078 = vpop.f32.mrb[0].mxu0
      %v1079 = vadd.f32 %v967, %v1078
      %v1080 = vpop.f32.mrb[0].mxu0
      %1081 = vmatprep.mubr.bf16.mxu0 0
      %1082 = vmatmul.mubr.bf16.gmra.mrb[0].mxu0 %v934
      %v1083 = vpop.f32.mrb[0].mxu0
      %v1084 = vadd.f32 %v967, %v1083
      %v1085 = vpop.f32.mrb[0].mxu0
      %v1086 = vpop.f32.mrb[0].mxu0
      %v1087 = vadd.f32 %v967, %v1086
      %v1088 = vpop.f32.mrb[0].mxu0
      %1089 = vmatprep.mubr.bf16.mxu0 0
      %1090 = vmatmul.mubr.bf16.gmra.mrb[0].mxu0 %v935
      %v1091 = vpop.f32.mrb[0].mxu0
      %v1092 = vadd.f32 %v967, %v1091
      %v1093 = vpop.f32.mrb[0].mxu0
      %v1094 = vpop.f32.mrb[0].mxu0
      %v1095 = vadd.f32 %v967, %v1094
      %v1096 = vpop.f32.mrb[0].mxu0
      %1097 = vmatprep.mubr.bf16.mxu0 0
      %1098 = vmatmul.mubr.bf16.gmra.mrb[0].mxu0 %v936
      %v1099 = vpop.f32.mrb[0].mxu0
      %v1100 = vadd.f32 %v967, %v1099
      %v1101 = vpop.f32.mrb[0].mxu0
      %v1102 = vpop.f32.mrb[0].mxu0
      %v1103 = vadd.f32 %v967, %v1102
      %v1104 = vpop.f32.mrb[0].mxu0
      %1105 = vmatprep.mubr.bf16.mxu0 0
      %1106 = vmatmul.mubr.bf16.gmra.mrb[0].mxu0 %v937
      %v1107 = vpop.f32.mrb[0].mxu0
      %v1108 = vadd.f32 %v967, %v1107
      %v1109 = vpop.f32.mrb[0].mxu0
      %v1110 = vpop.f32.mrb[0].mxu0
      %v1111 = vadd.f32 %v967, %v1110
      %v1112 = vpop.f32.mrb[0].mxu0
      %1113 = vmatprep.mubr.bf16.mxu0 0
      %1114 = vmatmul.mubr.bf16.gmra.mrb[0].mxu0 %v938
      %v1115 = vpop.f32.mrb[0].mxu0
      %v1116 = vadd.f32 %v967, %v1115
      %v1117 = vpop.f32.mrb[0].mxu0
      %v1118 = vpop.f32.mrb[0].mxu0
      %v1119 = vadd.f32 %v967, %v1118
      %v1120 = vpop.f32.mrb[0].mxu0
      %1121 = vmatprep.mubr.bf16.mxu0 0
      %1122 = vmatmul.mubr.bf16.gmra.mrb[0].mxu0 %v939
      %v1123 = vpop.f32.mrb[0].mxu0
      %v1124 = vadd.f32 %v967, %v1123
      %v1125 = vpop.f32.mrb[0].mxu0
      %v1126 = vpop.f32.mrb[0].mxu0
      %v1127 = vadd.f32 %v967, %v1126
      %v1128 = vpop.f32.mrb[0].mxu0
      %1129 = vmatprep.mubr.bf16.mxu0 0
      %1130 = vmatmul.mubr.bf16.gmra.mrb[0].mxu0 %v940
      %v1131 = vpop.f32.mrb[0].mxu0
      %v1132 = vadd.f32 %v967, %v1131
      %v1133 = vpop.f32.mrb[0].mxu0
      %v1134 = vpop.f32.mrb[0].mxu0
      %v1135 = vadd.f32 %v967, %v1134
      %v1136 = vpop.f32.mrb[0].mxu0
      %1137 = vmatprep.mubr.bf16.mxu0 0
      %1138 = vmatmul.mubr.bf16.gmra.mrb[0].mxu0 %v941
      %v1139 = vpop.f32.mrb[0].mxu0
      %v1140 = vadd.f32 %v967, %v1139
      %v1141 = vpop.f32.mrb[0].mxu0
      %v1142 = vpop.f32.mrb[0].mxu0
      %v1143 = vadd.f32 %v967, %v1142
      %v1144 = vpop.f32.mrb[0].mxu0
      %1145 = vmatprep.mubr.bf16.mxu0 0
      %1146 = vmatmul.mubr.bf16.gmra.mrb[0].mxu0 %v942
      %v1147 = vpop.f32.mrb[0].mxu0
      %v1148 = vadd.f32 %v967, %v1147
      %v1149 = vpop.f32.mrb[0].mxu0
      %v1150 = vpop.f32.mrb[0].mxu0
      %v1151 = vadd.f32 %v967, %v1150
      %v1152 = vpop.f32.mrb[0].mxu0
      %1153 = vmatprep.mubr.bf16.mxu0 0
      %1154 = vmatmul.mubr.bf16.gmra.mrb[0].mxu0 %v943
      %v1155 = vpop.f32.mrb[0].mxu0
      %v1156 = vadd.f32 %v967, %v1155
      %v1157 = vpop.f32.mrb[0].mxu0
      %v1158 = vpop.f32.mrb[0].mxu0
      %v1159 = vadd.f32 %v967, %v1158
      %v1160 = vpop.f32.mrb[0].mxu0
      %1161 = vmatprep.mubr.bf16.mxu0 0
      %1162 = vmatmul.mubr.bf16.gmra.mrb[0].mxu0 %v944
      %v1163 = vpop.f32.mrb[0].mxu0
      %v1164 = vadd.f32 %v967, %v1163
      %v1165 = vpop.f32.mrb[0].mxu0
      %v1166 = vpop.f32.mrb[0].mxu0
      %v1167 = vadd.f32 %v967, %v1166
      %v1168 = vpop.f32.mrb[0].mxu0
      %1169 = vmatprep.mubr.bf16.mxu0 0
      %1170 = vmatmul.mubr.bf16.gmra.mrb[0].mxu0 %v945
      %v1171 = vpop.f32.mrb[0].mxu0
      %v1172 = vadd.f32 %v967, %v1171
      %v1173 = vpop.f32.mrb[0].mxu0
      %v1174 = vpop.f32.mrb[0].mxu0
      %v1175 = vadd.f32 %v967, %v1174
      %v1176 = vpop.f32.mrb[0].mxu0
      %1177 = vdwg.mxu0
      %v1178 = vmax.f32 %v1052, 0.0
      %v1179 = vmax.f32 %v1055, 0.0
      %v1180 = vmax.f32 %v1060, 0.0
      %v1181 = vmax.f32 %v1063, 0.0
      %v1182 = vmax.f32 %v1068, 0.0
      %v1183 = vmax.f32 %v1071, 0.0
      %v1184 = vmax.f32 %v1076, 0.0
      %v1185 = vmax.f32 %v1079, 0.0
      %v1186 = vmax.f32 %v1084, 0.0
      %v1187 = vmax.f32 %v1087, 0.0
      %v1188 = vmax.f32 %v1092, 0.0
      %v1189 = vmax.f32 %v1095, 0.0
      %v1190 = vmax.f32 %v1100, 0.0
      %v1191 = vmax.f32 %v1103, 0.0
      %v1192 = vmax.f32 %v1108, 0.0
      %v1193 = vmax.f32 %v1111, 0.0
      %v1194 = vmax.f32 %v1116, 0.0
      %v1195 = vmax.f32 %v1119, 0.0
      %v1196 = vmax.f32 %v1124, 0.0
      %v1197 = vmax.f32 %v1127, 0.0
      %v1198 = vmax.f32 %v1132, 0.0
      %v1199 = vmax.f32 %v1135, 0.0
      %v1200 = vmax.f32 %v1140, 0.0
      %v1201 = vmax.f32 %v1143, 0.0
      %v1202 = vmax.f32 %v1148, 0.0
      %v1203 = vmax.f32 %v1151, 0.0
      %v1204 = vmax.f32 %v1156, 0.0
      %v1205 = vmax.f32 %v1159, 0.0
      %v1206 = vmax.f32 %v1164, 0.0
      %v1207 = vmax.f32 %v1167, 0.0
      %v1208 = vmax.f32 %v1172, 0.0
      %v1209 = vmax.f32 %v1175, 0.0
      %v1210 = vpack.c.bf16 %v1179, %v1178
      %v1211 = vpack.c.bf16 %v1181, %v1180
      %v1212 = vpack.c.bf16 %v1183, %v1182
      %v1213 = vpack.c.bf16 %v1185, %v1184
      %v1214 = vpack.c.bf16 %v1187, %v1186
      %v1215 = vpack.c.bf16 %v1189, %v1188
      %v1216 = vpack.c.bf16 %v1191, %v1190
      %v1217 = vpack.c.bf16 %v1193, %v1192
      %v1218 = vpack.c.bf16 %v1195, %v1194
      %v1219 = vpack.c.bf16 %v1197, %v1196
      %v1220 = vpack.c.bf16 %v1199, %v1198
      %v1221 = vpack.c.bf16 %v1201, %v1200
      %v1222 = vpack.c.bf16 %v1203, %v1202
      %v1223 = vpack.c.bf16 %v1205, %v1204
      %v1224 = vpack.c.bf16 %v1207, %v1206
      %v1225 = vpack.c.bf16 %v1209, %v1208
      %v1226 = vld [vmem:[%s7] sm:$0xf]
      %v1227 = vld [vmem:[%s7 + $0x4] sm:$0xf]
      %v1228 = vld [vmem:[%s7 + $0x8] sm:$0xf]
      %v1229 = vld [vmem:[%s7 + $0xc] sm:$0xf]
      %v1230 = vld [vmem:[%s7 + $0x10] sm:$0xf]
      %v1231 = vld [vmem:[%s7 + $0x14] sm:$0xf]
      %v1232 = vld [vmem:[%s7 + $0x18] sm:$0xf]
      %v1233 = vld [vmem:[%s7 + $0x1c] sm:$0xf]
      %v1234 = vld [vmem:[%s7 + $0x20] sm:$0xf]
      %v1235 = vld [vmem:[%s7 + $0x24] sm:$0xf]
      %v1236 = vld [vmem:[%s7 + $0x28] sm:$0xf]
      %v1237 = vld [vmem:[%s7 + $0x2c] sm:$0xf]
      %v1238 = vld [vmem:[%s7 + $0x30] sm:$0xf]
      %v1239 = vld [vmem:[%s7 + $0x34] sm:$0xf]
      %v1240 = vld [vmem:[%s7 + $0x38] sm:$0xf]
      %v1241 = vld [vmem:[%s7 + $0x3c] sm:$0xf]
      %v1242 = vld [vmem:[%s8] sm:$0x1]
      %v1244 = vlaneseq
      %v1245 = vshrl.u32 %v1244, 7
      %v1246 = vsub.s32 0, %v1245
      %v1247 = vrot.slane %v1242, %v1246
      %v1265 = vunpack.c.l.b16 %v1226
      %v1266 = vunpack.c.l.b16 %v1227
      %v1267 = vunpack.c.l.b16 %v1228
      %v1268 = vunpack.c.l.b16 %v1229
      %v1269 = vunpack.c.l.b16 %v1230
      %v1270 = vunpack.c.l.b16 %v1231
      %v1271 = vunpack.c.l.b16 %v1232
      %v1272 = vunpack.c.l.b16 %v1233
      %v1273 = vunpack.c.l.b16 %v1234
      %v1274 = vunpack.c.l.b16 %v1235
      %v1275 = vunpack.c.l.b16 %v1236
      %v1276 = vunpack.c.l.b16 %v1237
      %v1277 = vunpack.c.l.b16 %v1238
      %v1278 = vunpack.c.l.b16 %v1239
      %v1279 = vunpack.c.l.b16 %v1240
      %v1280 = vunpack.c.l.b16 %v1241
      %v1281 = vpack.c.b16 %v1266, %v1265
      %v1282 = vpack.c.b16 %v1268, %v1267
      %v1283 = vpack.c.b16 %v1270, %v1269
      %v1284 = vpack.c.b16 %v1272, %v1271
      %v1285 = vpack.c.b16 %v1274, %v1273
      %v1286 = vpack.c.b16 %v1276, %v1275
      %v1287 = vpack.c.b16 %v1278, %v1277
      %v1288 = vpack.c.b16 %v1280, %v1279
      %1297 = vmatprep.subr.bf16.mxu0 0
      %1298 = vmatpush1.bf16.msra.mxu0 %v1281
      %1299 = vmatprep.subr.bf16.mxu0 0
      %1300 = vmatpush1.bf16.msra.mxu0 %v1282
      %1301 = vmatprep.subr.bf16.mxu0 0
      %1302 = vmatpush1.bf16.msra.mxu0 %v1283
      %1303 = vmatprep.subr.bf16.mxu0 0
      %1304 = vmatpush1.bf16.msra.mxu0 %v1284
      %1305 = vmatprep.subr.bf16.mxu0 0
      %1306 = vmatpush1.bf16.msra.mxu0 %v1285
      %1307 = vmatprep.subr.bf16.mxu0 0
      %1308 = vmatpush1.bf16.msra.mxu0 %v1286
      %1309 = vmatprep.subr.bf16.mxu0 0
      %1310 = vmatpush1.bf16.msra.mxu0 %v1287
      %1311 = vmatprep.subr.bf16.mxu0 0
      %1312 = vmatpush1.bf16.msra.mxu0 %v1288
      %1313 = vmatprep.subr.bf16.mxu0 0
      %1314 = vmatpush1.bf16.msra.mxu0 0
      %1315 = vmatprep.subr.bf16.mxu0 0
      %1316 = vmatpush1.bf16.msra.mxu0 0
      %1317 = vmatprep.subr.bf16.mxu0 0
      %1318 = vmatpush1.bf16.msra.mxu0 0
      %1319 = vmatprep.subr.bf16.mxu0 0
      %1320 = vmatpush1.bf16.msra.mxu0 0
      %1321 = vmatprep.subr.bf16.mxu0 0
      %1322 = vmatpush1.bf16.msra.mxu0 0
      %1323 = vmatprep.subr.bf16.mxu0 0
      %1324 = vmatpush1.bf16.msra.mxu0 0
      %1325 = vmatprep.subr.bf16.mxu0 0
      %1326 = vmatpush1.bf16.msra.mxu0 0
      %1327 = vmatprep.subr.bf16.mxu0 0
      %1328 = vmatpush1.bf16.msra.mxu0 0
      %1329 = vmatprep.mubr.bf16.mxu0 0
      %1330 = vmatmul.mubr.bf16.gmra.mrb[0].mxu0 %v1210
      %v1331 = vpop.f32.mrb[0].mxu0
      %v1332 = vadd.f32 %v1247, %v1331
      %v1333 = vpop.f32.mrb[0].mxu0
      %v1334 = vpop.f32.mrb[0].mxu0
      %v1335 = vadd.f32 %v1247, %v1334
      %v1336 = vpop.f32.mrb[0].mxu0
      %1337 = vmatprep.mubr.bf16.mxu0 0
      %1338 = vmatmul.mubr.bf16.gmra.mrb[0].mxu0 %v1211
      %v1339 = vpop.f32.mrb[0].mxu0
      %v1340 = vadd.f32 %v1247, %v1339
      %v1341 = vpop.f32.mrb[0].mxu0
      %v1342 = vpop.f32.mrb[0].mxu0
      %v1343 = vadd.f32 %v1247, %v1342
      %v1344 = vpop.f32.mrb[0].mxu0
      %1345 = vmatprep.mubr.bf16.mxu0 0
      %1346 = vmatmul.mubr.bf16.gmra.mrb[0].mxu0 %v1212
      %v1347 = vpop.f32.mrb[0].mxu0
      %v1348 = vadd.f32 %v1247, %v1347
      %v1349 = vpop.f32.mrb[0].mxu0
      %v1350 = vpop.f32.mrb[0].mxu0
      %v1351 = vadd.f32 %v1247, %v1350
      %v1352 = vpop.f32.mrb[0].mxu0
      %1353 = vmatprep.mubr.bf16.mxu0 0
      %1354 = vmatmul.mubr.bf16.gmra.mrb[0].mxu0 %v1213
      %v1355 = vpop.f32.mrb[0].mxu0
      %v1356 = vadd.f32 %v1247, %v1355
      %v1357 = vpop.f32.mrb[0].mxu0
      %v1358 = vpop.f32.mrb[0].mxu0
      %v1359 = vadd.f32 %v1247, %v1358
      %v1360 = vpop.f32.mrb[0].mxu0
      %1361 = vmatprep.mubr.bf16.mxu0 0
      %1362 = vmatmul.mubr.bf16.gmra.mrb[0].mxu0 %v1214
      %v1363 = vpop.f32.mrb[0].mxu0
      %v1364 = vadd.f32 %v1247, %v1363
      %v1365 = vpop.f32.mrb[0].mxu0
      %v1366 = vpop.f32.mrb[0].mxu0
      %v1367 = vadd.f32 %v1247, %v1366
      %v1368 = vpop.f32.mrb[0].mxu0
      %1369 = vmatprep.mubr.bf16.mxu0 0
      %1370 = vmatmul.mubr.bf16.gmra.mrb[0].mxu0 %v1215
      %v1371 = vpop.f32.mrb[0].mxu0
      %v1372 = vadd.f32 %v1247, %v1371
      %v1373 = vpop.f32.mrb[0].mxu0
      %v1374 = vpop.f32.mrb[0].mxu0
      %v1375 = vadd.f32 %v1247, %v1374
      %v1376 = vpop.f32.mrb[0].mxu0
      %1377 = vmatprep.mubr.bf16.mxu0 0
      %1378 = vmatmul.mubr.bf16.gmra.mrb[0].mxu0 %v1216
      %v1379 = vpop.f32.mrb[0].mxu0
      %v1380 = vadd.f32 %v1247, %v1379
      %v1381 = vpop.f32.mrb[0].mxu0
      %v1382 = vpop.f32.mrb[0].mxu0
      %v1383 = vadd.f32 %v1247, %v1382
      %v1384 = vpop.f32.mrb[0].mxu0
      %1385 = vmatprep.mubr.bf16.mxu0 0
      %1386 = vmatmul.mubr.bf16.gmra.mrb[0].mxu0 %v1217
      %v1387 = vpop.f32.mrb[0].mxu0
      %v1388 = vadd.f32 %v1247, %v1387
      %v1389 = vpop.f32.mrb[0].mxu0
      %v1390 = vpop.f32.mrb[0].mxu0
      %v1391 = vadd.f32 %v1247, %v1390
      %v1392 = vpop.f32.mrb[0].mxu0
      %1393 = vmatprep.mubr.bf16.mxu0 0
      %1394 = vmatmul.mubr.bf16.gmra.mrb[0].mxu0 %v1218
      %v1395 = vpop.f32.mrb[0].mxu0
      %v1396 = vadd.f32 %v1247, %v1395
      %v1397 = vpop.f32.mrb[0].mxu0
      %v1398 = vpop.f32.mrb[0].mxu0
      %v1399 = vadd.f32 %v1247, %v1398
      %v1400 = vpop.f32.mrb[0].mxu0
      %1401 = vmatprep.mubr.bf16.mxu0 0
      %1402 = vmatmul.mubr.bf16.gmra.mrb[0].mxu0 %v1219
      %v1403 = vpop.f32.mrb[0].mxu0
      %v1404 = vadd.f32 %v1247, %v1403
      %v1405 = vpop.f32.mrb[0].mxu0
      %v1406 = vpop.f32.mrb[0].mxu0
      %v1407 = vadd.f32 %v1247, %v1406
      %v1408 = vpop.f32.mrb[0].mxu0
      %1409 = vmatprep.mubr.bf16.mxu0 0
      %1410 = vmatmul.mubr.bf16.gmra.mrb[0].mxu0 %v1220
      %v1411 = vpop.f32.mrb[0].mxu0
      %v1412 = vadd.f32 %v1247, %v1411
      %v1413 = vpop.f32.mrb[0].mxu0
      %v1414 = vpop.f32.mrb[0].mxu0
      %v1415 = vadd.f32 %v1247, %v1414
      %v1416 = vpop.f32.mrb[0].mxu0
      %1417 = vmatprep.mubr.bf16.mxu0 0
      %1418 = vmatmul.mubr.bf16.gmra.mrb[0].mxu0 %v1221
      %v1419 = vpop.f32.mrb[0].mxu0
      %v1420 = vadd.f32 %v1247, %v1419
      %v1421 = vpop.f32.mrb[0].mxu0
      %v1422 = vpop.f32.mrb[0].mxu0
      %v1423 = vadd.f32 %v1247, %v1422
      %v1424 = vpop.f32.mrb[0].mxu0
      %1425 = vmatprep.mubr.bf16.mxu0 0
      %1426 = vmatmul.mubr.bf16.gmra.mrb[0].mxu0 %v1222
      %v1427 = vpop.f32.mrb[0].mxu0
      %v1428 = vadd.f32 %v1247, %v1427
      %v1429 = vpop.f32.mrb[0].mxu0
      %v1430 = vpop.f32.mrb[0].mxu0
      %v1431 = vadd.f32 %v1247, %v1430
      %v1432 = vpop.f32.mrb[0].mxu0
      %1433 = vmatprep.mubr.bf16.mxu0 0
      %1434 = vmatmul.mubr.bf16.gmra.mrb[0].mxu0 %v1223
      %v1435 = vpop.f32.mrb[0].mxu0
      %v1436 = vadd.f32 %v1247, %v1435
      %v1437 = vpop.f32.mrb[0].mxu0
      %v1438 = vpop.f32.mrb[0].mxu0
      %v1439 = vadd.f32 %v1247, %v1438
      %v1440 = vpop.f32.mrb[0].mxu0
      %1441 = vmatprep.mubr.bf16.mxu0 0
      %1442 = vmatmul.mubr.bf16.gmra.mrb[0].mxu0 %v1224
      %v1443 = vpop.f32.mrb[0].mxu0
      %v1444 = vadd.f32 %v1247, %v1443
      %v1445 = vpop.f32.mrb[0].mxu0
      %v1446 = vpop.f32.mrb[0].mxu0
      %v1447 = vadd.f32 %v1247, %v1446
      %v1448 = vpop.f32.mrb[0].mxu0
      %1449 = vmatprep.mubr.bf16.mxu0 0
      %1450 = vmatmul.mubr.bf16.gmra.mrb[0].mxu0 %v1225
      %v1451 = vpop.f32.mrb[0].mxu0
      %v1452 = vadd.f32 %v1247, %v1451
      %v1453 = vpop.f32.mrb[0].mxu0
      %v1454 = vpop.f32.mrb[0].mxu0
      %v1455 = vadd.f32 %v1247, %v1454
      %v1456 = vpop.f32.mrb[0].mxu0
      %1457 = vdwg.mxu0
      %v1458 = vmul.f32 %v1332, 0.5
      %v1459 = vmul.f32 %v1335, 0.5
      %v1460 = vmul.f32 %v1340, 0.5
      %v1461 = vmul.f32 %v1343, 0.5
      %v1462 = vmul.f32 %v1348, 0.5
      %v1463 = vmul.f32 %v1351, 0.5
      %v1464 = vmul.f32 %v1356, 0.5
      %v1465 = vmul.f32 %v1359, 0.5
      %v1466 = vmul.f32 %v1364, 0.5
      %v1467 = vmul.f32 %v1367, 0.5
      %v1468 = vmul.f32 %v1372, 0.5
      %v1469 = vmul.f32 %v1375, 0.5
      %v1470 = vmul.f32 %v1380, 0.5
      %v1471 = vmul.f32 %v1383, 0.5
      %v1472 = vmul.f32 %v1388, 0.5
      %v1473 = vmul.f32 %v1391, 0.5
      %v1474 = vmul.f32 %v1396, 0.5
      %v1475 = vmul.f32 %v1399, 0.5
      %v1476 = vmul.f32 %v1404, 0.5
      %v1477 = vmul.f32 %v1407, 0.5
      %v1478 = vmul.f32 %v1412, 0.5
      %v1479 = vmul.f32 %v1415, 0.5
      %v1480 = vmul.f32 %v1420, 0.5
      %v1481 = vmul.f32 %v1423, 0.5
      %v1482 = vmul.f32 %v1428, 0.5
      %v1483 = vmul.f32 %v1431, 0.5
      %v1484 = vmul.f32 %v1436, 0.5
      %v1485 = vmul.f32 %v1439, 0.5
      %v1486 = vmul.f32 %v1444, 0.5
      %v1487 = vmul.f32 %v1447, 0.5
      %v1488 = vmul.f32 %v1452, 0.5
      %v1489 = vmul.f32 %v1455, 0.5
      %v1490 = vtanh.pop %v1458
      %v1491 = vtanh.pop %v1459
      %v1492 = vtanh.pop %v1460
      %v1493 = vtanh.pop %v1461
      %v1494 = vtanh.pop %v1462
      %v1495 = vtanh.pop %v1463
      %v1496 = vtanh.pop %v1464
      %v1497 = vtanh.pop %v1465
      %v1498 = vtanh.pop %v1466
      %v1499 = vtanh.pop %v1467
      %v1500 = vtanh.pop %v1468
      %v1501 = vtanh.pop %v1469
      %v1502 = vtanh.pop %v1470
      %v1503 = vtanh.pop %v1471
      %v1504 = vtanh.pop %v1472
      %v1505 = vtanh.pop %v1473
      %v1506 = vtanh.pop %v1474
      %v1507 = vtanh.pop %v1475
      %v1508 = vtanh.pop %v1476
      %v1509 = vtanh.pop %v1477
      %v1510 = vtanh.pop %v1478
      %v1511 = vtanh.pop %v1479
      %v1512 = vtanh.pop %v1480
      %v1513 = vtanh.pop %v1481
      %v1514 = vtanh.pop %v1482
      %v1515 = vtanh.pop %v1483
      %v1516 = vtanh.pop %v1484
      %v1517 = vtanh.pop %v1485
      %v1518 = vtanh.pop %v1486
      %v1519 = vtanh.pop %v1487
      %v1520 = vtanh.pop %v1488
      %v1521 = vtanh.pop %v1489
      %v1522 = vmul.f32 %v1490, 0.5
      %v1523 = vmul.f32 %v1491, 0.5
      %v1524 = vmul.f32 %v1492, 0.5
      %v1525 = vmul.f32 %v1493, 0.5
      %v1526 = vmul.f32 %v1494, 0.5
      %v1527 = vmul.f32 %v1495, 0.5
      %v1528 = vmul.f32 %v1496, 0.5
      %v1529 = vmul.f32 %v1497, 0.5
      %v1530 = vmul.f32 %v1498, 0.5
      %v1531 = vmul.f32 %v1499, 0.5
      %v1532 = vmul.f32 %v1500, 0.5
      %v1533 = vmul.f32 %v1501, 0.5
      %v1534 = vmul.f32 %v1502, 0.5
      %v1535 = vmul.f32 %v1503, 0.5
      %v1536 = vmul.f32 %v1504, 0.5
      %v1537 = vmul.f32 %v1505, 0.5
      %v1538 = vmul.f32 %v1506, 0.5
      %v1539 = vmul.f32 %v1507, 0.5
      %v1540 = vmul.f32 %v1508, 0.5
      %v1541 = vmul.f32 %v1509, 0.5
      %v1542 = vmul.f32 %v1510, 0.5
      %v1543 = vmul.f32 %v1511, 0.5
      %v1544 = vmul.f32 %v1512, 0.5
      %v1545 = vmul.f32 %v1513, 0.5
      %v1546 = vmul.f32 %v1514, 0.5
      %v1547 = vmul.f32 %v1515, 0.5
      %v1548 = vmul.f32 %v1516, 0.5
      %v1549 = vmul.f32 %v1517, 0.5
      %v1550 = vmul.f32 %v1518, 0.5
      %v1551 = vmul.f32 %v1519, 0.5
      %v1552 = vmul.f32 %v1520, 0.5
      %v1553 = vmul.f32 %v1521, 0.5
      %v1554 = vadd.f32 %v1522, 0.5
      %v1555 = vadd.f32 %v1523, 0.5
      %v1556 = vadd.f32 %v1524, 0.5
      %v1557 = vadd.f32 %v1525, 0.5
      %v1558 = vadd.f32 %v1526, 0.5
      %v1559 = vadd.f32 %v1527, 0.5
      %v1560 = vadd.f32 %v1528, 0.5
      %v1561 = vadd.f32 %v1529, 0.5
      %v1562 = vadd.f32 %v1530, 0.5
      %v1563 = vadd.f32 %v1531, 0.5
      %v1564 = vadd.f32 %v1532, 0.5
      %v1565 = vadd.f32 %v1533, 0.5
      %v1566 = vadd.f32 %v1534, 0.5
      %v1567 = vadd.f32 %v1535, 0.5
      %v1568 = vadd.f32 %v1536, 0.5
      %v1569 = vadd.f32 %v1537, 0.5
      %v1570 = vadd.f32 %v1538, 0.5
      %v1571 = vadd.f32 %v1539, 0.5
      %v1572 = vadd.f32 %v1540, 0.5
      %v1573 = vadd.f32 %v1541, 0.5
      %v1574 = vadd.f32 %v1542, 0.5
      %v1575 = vadd.f32 %v1543, 0.5
      %v1576 = vadd.f32 %v1544, 0.5
      %v1577 = vadd.f32 %v1545, 0.5
      %v1578 = vadd.f32 %v1546, 0.5
      %v1579 = vadd.f32 %v1547, 0.5
      %v1580 = vadd.f32 %v1548, 0.5
      %v1581 = vadd.f32 %v1549, 0.5
      %v1582 = vadd.f32 %v1550, 0.5
      %v1583 = vadd.f32 %v1551, 0.5
      %v1584 = vadd.f32 %v1552, 0.5
      %v1585 = vadd.f32 %v1553, 0.5
      %v1586 = vpack.c.bf16 %v1555, %v1554
      %v1587 = vpack.c.bf16 %v1557, %v1556
      %v1588 = vpack.c.bf16 %v1559, %v1558
      %v1589 = vpack.c.bf16 %v1561, %v1560
      %v1590 = vpack.c.bf16 %v1563, %v1562
      %v1591 = vpack.c.bf16 %v1565, %v1564
      %v1592 = vpack.c.bf16 %v1567, %v1566
      %v1593 = vpack.c.bf16 %v1569, %v1568
      %v1594 = vpack.c.bf16 %v1571, %v1570
      %v1595 = vpack.c.bf16 %v1573, %v1572
      %v1596 = vpack.c.bf16 %v1575, %v1574
      %v1597 = vpack.c.bf16 %v1577, %v1576
      %v1598 = vpack.c.bf16 %v1579, %v1578
      %v1599 = vpack.c.bf16 %v1581, %v1580
      %v1600 = vpack.c.bf16 %v1583, %v1582
      %v1601 = vpack.c.bf16 %v1585, %v1584
      %v1618 = vunpack.c.l.b16 %v1586
      %v1619 = vunpack.c.h.b16 %v1586
      %v1620 = vunpack.c.l.b16 %v1587
      %v1621 = vunpack.c.h.b16 %v1587
      %v1622 = vunpack.c.l.b16 %v1588
      %v1623 = vunpack.c.h.b16 %v1588
      %v1624 = vunpack.c.l.b16 %v1589
      %v1625 = vunpack.c.h.b16 %v1589
      %v1626 = vunpack.c.l.b16 %v1590
      %v1627 = vunpack.c.h.b16 %v1590
      %v1628 = vunpack.c.l.b16 %v1591
      %v1629 = vunpack.c.h.b16 %v1591
      %v1630 = vunpack.c.l.b16 %v1592
      %v1631 = vunpack.c.h.b16 %v1592
      %v1632 = vunpack.c.l.b16 %v1593
      %v1633 = vunpack.c.h.b16 %v1593
      %v1634 = vunpack.c.l.b16 %v1594
      %v1635 = vunpack.c.h.b16 %v1594
      %v1636 = vunpack.c.l.b16 %v1595
      %v1637 = vunpack.c.h.b16 %v1595
      %v1638 = vunpack.c.l.b16 %v1596
      %v1639 = vunpack.c.h.b16 %v1596
      %v1640 = vunpack.c.l.b16 %v1597
      %v1641 = vunpack.c.h.b16 %v1597
      %v1642 = vunpack.c.l.b16 %v1598
      %v1643 = vunpack.c.h.b16 %v1598
      %v1644 = vunpack.c.l.b16 %v1599
      %v1645 = vunpack.c.h.b16 %v1599
      %v1646 = vunpack.c.l.b16 %v1600
      %v1647 = vunpack.c.h.b16 %v1600
      %v1648 = vunpack.c.l.b16 %v1601
      %v1649 = vunpack.c.h.b16 %v1601
      %v1650 = vpack.c.b16 %v1618, %v1618
      %v1651 = vpack.c.b16 %v1619, %v1619
      %v1652 = vpack.c.b16 %v1620, %v1620
      %v1653 = vpack.c.b16 %v1621, %v1621
      %v1654 = vpack.c.b16 %v1622, %v1622
      %v1655 = vpack.c.b16 %v1623, %v1623
      %v1656 = vpack.c.b16 %v1624, %v1624
      %v1657 = vpack.c.b16 %v1625, %v1625
      %v1658 = vpack.c.b16 %v1626, %v1626
      %v1659 = vpack.c.b16 %v1627, %v1627
      %v1660 = vpack.c.b16 %v1628, %v1628
      %v1661 = vpack.c.b16 %v1629, %v1629
      %v1662 = vpack.c.b16 %v1630, %v1630
      %v1663 = vpack.c.b16 %v1631, %v1631
      %v1664 = vpack.c.b16 %v1632, %v1632
      %v1665 = vpack.c.b16 %v1633, %v1633
      %v1666 = vpack.c.b16 %v1634, %v1634
      %v1667 = vpack.c.b16 %v1635, %v1635
      %v1668 = vpack.c.b16 %v1636, %v1636
      %v1669 = vpack.c.b16 %v1637, %v1637
      %v1670 = vpack.c.b16 %v1638, %v1638
      %v1671 = vpack.c.b16 %v1639, %v1639
      %v1672 = vpack.c.b16 %v1640, %v1640
      %v1673 = vpack.c.b16 %v1641, %v1641
      %v1674 = vpack.c.b16 %v1642, %v1642
      %v1675 = vpack.c.b16 %v1643, %v1643
      %v1676 = vpack.c.b16 %v1644, %v1644
      %v1677 = vpack.c.b16 %v1645, %v1645
      %v1678 = vpack.c.b16 %v1646, %v1646
      %v1679 = vpack.c.b16 %v1647, %v1647
      %v1680 = vpack.c.b16 %v1648, %v1648
      %v1681 = vpack.c.b16 %v1649, %v1649
      %1714 = vst [vmem:[%s334] sm:$0xf] %v1650
      %1715 = vst [vmem:[%s334 + $0x4] sm:$0xf] %v1651
      %1716 = vst [vmem:[%s334 + $0x8] sm:$0xf] %v1652
      %1717 = vst [vmem:[%s334 + $0xc] sm:$0xf] %v1653
      %1718 = vst [vmem:[%s334 + $0x10] sm:$0xf] %v1654
      %1719 = vst [vmem:[%s334 + $0x14] sm:$0xf] %v1655
      %1720 = vst [vmem:[%s334 + $0x18] sm:$0xf] %v1656
      %1721 = vst [vmem:[%s334 + $0x1c] sm:$0xf] %v1657
      %1722 = vst [vmem:[%s334 + $0x20] sm:$0xf] %v1658
      %1723 = vst [vmem:[%s334 + $0x24] sm:$0xf] %v1659
      %1724 = vst [vmem:[%s334 + $0x28] sm:$0xf] %v1660
      %1725 = vst [vmem:[%s334 + $0x2c] sm:$0xf] %v1661
      %1726 = vst [vmem:[%s334 + $0x30] sm:$0xf] %v1662
      %1727 = vst [vmem:[%s334 + $0x34] sm:$0xf] %v1663
      %1728 = vst [vmem:[%s334 + $0x38] sm:$0xf] %v1664
      %1729 = vst [vmem:[%s334 + $0x3c] sm:$0xf] %v1665
      %1730 = vst [vmem:[%s334 + $0x40] sm:$0xf] %v1666
      %1731 = vst [vmem:[%s334 + $0x44] sm:$0xf] %v1667
      %1732 = vst [vmem:[%s334 + $0x48] sm:$0xf] %v1668
      %1733 = vst [vmem:[%s334 + $0x4c] sm:$0xf] %v1669
      %1734 = vst [vmem:[%s334 + $0x50] sm:$0xf] %v1670
      %1735 = vst [vmem:[%s334 + $0x54] sm:$0xf] %v1671
      %1736 = vst [vmem:[%s334 + $0x58] sm:$0xf] %v1672
      %1737 = vst [vmem:[%s334 + $0x5c] sm:$0xf] %v1673
      %1738 = vst [vmem:[%s334 + $0x60] sm:$0xf] %v1674
      %1739 = vst [vmem:[%s334 + $0x64] sm:$0xf] %v1675
      %1740 = vst [vmem:[%s334 + $0x68] sm:$0xf] %v1676
      %1741 = vst [vmem:[%s334 + $0x6c] sm:$0xf] %v1677
      %1742 = vst [vmem:[%s334 + $0x70] sm:$0xf] %v1678
      %1743 = vst [vmem:[%s334 + $0x74] sm:$0xf] %v1679
      %1744 = vst [vmem:[%s334 + $0x78] sm:$0xf] %v1680
      %1745 = vst [vmem:[%s334 + $0x7c] sm:$0xf] %v1681
      %s1746 = smul.u32 32, %s20
      %p1747 = scmp.lt.s32.totalorder %s1746, 63
      %s1748 = scalar_select %p1747, %s1746, 63
      %s1749 = smul.addr %s1748, 4
      %s1750 = scalar_lea.vmem %s9, %s1749
      // Predicated region
      $region57: #{tsoc_forward.1} parent=55 // pred_check
        %p1751 = pneg %p232
      $region58: #{tsoc_forward.1} parent=55 // pred_check_branch
        %1753 = sbr.rel (%p1751) target = $region60
      $region59: #{tsoc_forward.1} parent=55 // pred_region
        %s1754 = smul.u32 32, %s20
      $region60: #{tsoc_forward.1} parent=55 // pred_fallthru
        _
    $region56: #{tsoc_forward.1} parent=5 // pred_fallthru
      _
    %p1755 = scmp.le.s32.totalorder 2, %s15
    // Predicated region
    $region61: #{tsoc_forward.1} parent=5 // pred_check
      %p1756 = pneg %p1755
    $region62: #{tsoc_forward.1} parent=5 // pred_check_branch
      %1758 = sbr.rel (%p1756) target = $region64
    $region63: #{tsoc_forward.1} parent=5 // pred_region
      %s1759 = ssub.s32 %s15, 2
      // Predicated region
      $region65: #{tsoc_forward.1} parent=63 // pred_check
        %p1760 = pneg %p238
      $region66: #{tsoc_forward.1} parent=63 // pred_check_branch
        %1762 = sbr.rel (%p1760) target = $region68
      $region67: #{tsoc_forward.1} parent=63 // pred_region
        %s1763 = smul.u32 32, %s21
        %p1764 = scmp.lt.s32.totalorder %s1763, 63
        %s1765 = scalar_select %p1764, %s1763, 63
        %s1766 = smul.addr %s1765, 4
        %s1767 = scalar_lea.vmem %s9, %s1766
      $region68: #{tsoc_forward.1} parent=63 // pred_fallthru
        _
    $region64: #{tsoc_forward.1} parent=5 // pred_fallthru
      _
  $region6: #{tsoc_forward.1} parent=0 // loop_footer
    %s19 = sadd.s32 1, %s15
  $region7: #{tsoc_forward.1} parent=0 // loop_footer_branch
    %14 = sbr.rel target = $region3
  $region8: #{tsoc_forward.1} parent=0 // loop_exit
    _

</llo_original>
